<compile_context>
chip_gen: v7x
topology: tpu7x:2x2x1
jax: 0.10.0
libtpu: 0.0.40
codegen_flags: <defaults>
</compile_context>

<pallas_src>
import math

import jax
import jax.numpy as jnp
from jax.experimental import pallas as pl
from jax.experimental.pallas import tpu as pltpu


def linear_kernel(x_ref, w_ref, b_ref, o_ref):
    # x_ref: (M, K) full rows (f32, resident across grid steps)
    # w_ref: (K, TN) pre-transposed weight tile (bf16 or f32)
    # b_ref: (1, TN) bias tile (f32)
    # o_ref: (M, TN) f32 output tile
    w = w_ref[...]
    x = x_ref[...].astype(w.dtype)          # VPU cast; HBM x traffic stays f32
    acc = jnp.dot(x, w, preferred_element_type=jnp.float32)   # MXU, f32 acc
    o_ref[...] = (acc + b_ref[...]).astype(o_ref.dtype)


def init_linear_params(weight, bias, *, param_dtype=jnp.bfloat16):
    """One-time parameter prep (call at init, not per forward).

    weight: (N, K) as stored by torch.nn.Linear -> returns (K, N) param_dtype.
    bias:   (N,)                               -> returns (1, N) f32.
    """
    w_t = jnp.asarray(weight).T.astype(param_dtype)       # (K, N), contiguous copy once
    b2 = jnp.asarray(bias).reshape(1, -1).astype(jnp.float32)
    return w_t, b2


def linear_pallas(x, weight_t, bias2, *, tn=768):
    """x: (..., K); weight_t: (K, N) pre-transposed; bias2: (1, N) f32.

    weight_t may be bf16 or f32; x is cast to weight_t.dtype inside the kernel
    and the matmul accumulates in f32.  Output is f32 (module semantics).
    """
    orig_shape = x.shape
    K = orig_shape[-1]
    Kw, N = weight_t.shape
    assert Kw == K, "weight_t must be (in_features, out_features)"
    assert bias2.shape == (1, N)
    assert N % tn == 0, "output features must tile evenly"
    M = math.prod(orig_shape[:-1])

    x2 = x.reshape(M, K)                     # metadata-only reshape

    grid = (N // tn,)

    bytes_accessed = int(
        x2.size * x2.dtype.itemsize
        + weight_t.size * weight_t.dtype.itemsize
        + bias2.size * bias2.dtype.itemsize
        + M * N * 4  # f32 output
    )

    out = pl.pallas_call(
        linear_kernel,
        out_shape=jax.ShapeDtypeStruct((M, N), jnp.float32),
        grid_spec=pltpu.PrefetchScalarGridSpec(
            num_scalar_prefetch=0,
            grid=grid,
            in_specs=[
                pl.BlockSpec((M, K), lambda j: (0, 0)),    # all rows, full K (VMEM-resident)
                pl.BlockSpec((K, tn), lambda j: (0, j)),   # (K, TN) weight tile, no transpose
                pl.BlockSpec((1, tn), lambda j: (0, j)),   # bias tile
            ],
            out_specs=pl.BlockSpec((M, tn), lambda j: (0, j)),
        ),
        compiler_params=pltpu.CompilerParams(
            dimension_semantics=("parallel",),
        ),
        cost_estimate=pl.CostEstimate(
            flops=2 * M * K * N,
            transcendentals=0,
            bytes_accessed=bytes_accessed,
        ),
    )(x2, weight_t, bias2)

    return out.reshape(*orig_shape[:-1], N)


if __name__ == "__main__":
    key = jax.random.PRNGKey(0)
    k_x, k_w, k_b = jax.random.split(key, 3)

    in_features, out_features = 384, 1536
    x380 = jax.random.normal(k_x, (1, 14, 14, in_features), dtype=jnp.float32)

    # Deterministic parameter init (mimics torch.nn.Linear uniform range).
    bound = 1.0 / math.sqrt(float(in_features))
    weight = jax.random.uniform(
        k_w, (out_features, in_features), minval=-bound, maxval=bound,
        dtype=jnp.float32)
    bias = jax.random.uniform(
        k_b, (out_features,), minval=-bound, maxval=bound, dtype=jnp.float32)

    # One-time init-side prep: transpose weight to (K, N), cast to bf16,
    # reshape bias.  None of this happens per forward call.
    w_t, b2 = init_linear_params(weight, bias, param_dtype=jnp.bfloat16)
    w_t = jax.block_until_ready(w_t)
    b2 = jax.block_until_ready(b2)

    x381 = linear_pallas(x380, w_t, b2)
    jax.block_until_ready(x381)
    assert x381.shape == (1, 14, 14, out_features)
    assert x381.dtype == jnp.float32

    # Reference with the same operand rounding (bf16 operands, f32 math) so
    # the check isolates the kernel's matmul+bias logic.
    x_cast = x380.astype(jnp.bfloat16).astype(jnp.float32)
    w_cast = w_t.astype(jnp.float32)
    ref = jnp.einsum("bhwk,kn->bhwn", x_cast, w_cast,
                     precision="highest") + bias
    assert jnp.allclose(x381, ref, atol=2e-3, rtol=2e-3), (
        float(jnp.max(jnp.abs(x381 - ref))))

    # Loose sanity check against the full-f32 ground truth (bf16 rounding only).
    ref_f32 = jnp.einsum("bhwk,nk->bhwn", x380, weight,
                         precision="highest") + bias
    assert jnp.allclose(x381, ref_f32, atol=5e-2, rtol=5e-2)

    print("KERNEL_OK")
</pallas_src>

<mosaic_0001>
module attributes {stable_mosaic.version = 11 : i64} {
  func.func @linear_kernel(%arg0: i32, %arg1: memref<196x384xf32, #tpu.memory_space<vmem>>, %arg2: memref<384x768xbf16, #tpu.memory_space<vmem>>, %arg3: memref<1x768xf32, #tpu.memory_space<vmem>>, %arg4: memref<196x768xf32, #tpu.memory_space<vmem>>) attributes {dimension_semantics = [#tpu.dimension_semantics<parallel>], iteration_bounds = array<i64: 2>, scalar_prefetch = 0 : i64, scratch_operands = 0 : i64, tpu.core_type = #tpu.core_type<tc>, window_params = [{pipeline_mode = #tpu.pipeline_mode<synchronous>, transform_indices = @transform_0, window_bounds = array<i64: 196, 384>}, {transform_indices = @transform_1, window_bounds = array<i64: 384, 768>}, {transform_indices = @transform_2, window_bounds = array<i64: 1, 768>}, {transform_indices = @transform_3, window_bounds = array<i64: 196, 768>}]} {
    %c0 = arith.constant 0 : index
    %c0_0 = arith.constant 0 : index
    %0 = vector.load %arg2[%c0, %c0_0] : memref<384x768xbf16, #tpu.memory_space<vmem>>, vector<384x768xbf16>
    %c0_1 = arith.constant 0 : index
    %c0_2 = arith.constant 0 : index
    %1 = vector.load %arg1[%c0_1, %c0_2] : memref<196x384xf32, #tpu.memory_space<vmem>>, vector<196x384xf32>
    %2 = arith.truncf %1 : vector<196x384xf32> to vector<196x384xbf16>
    %cst = arith.constant dense<0.000000e+00> : vector<196x768xf32>
    %3 = tpu.matmul %2, %0, %cst {dimension_numbers = #tpu.dot_dimension_numbers<[1], [0], [0], [1], [0, 0, 1, 1], [], []>} : vector<196x384xbf16>, vector<384x768xbf16>, vector<196x768xf32> -> vector<196x768xf32>
    %c0_3 = arith.constant 0 : index
    %c0_4 = arith.constant 0 : index
    %4 = vector.load %arg3[%c0_3, %c0_4] : memref<1x768xf32, #tpu.memory_space<vmem>>, vector<1x768xf32>
    %5 = vector.broadcast %4 : vector<1x768xf32> to vector<196x768xf32>
    %6 = arith.addf %3, %5 : vector<196x768xf32>
    %c0_5 = arith.constant 0 : index
    %c0_6 = arith.constant 0 : index
    %7 = vector.load %arg4[%c0_5, %c0_6] : memref<196x768xf32, #tpu.memory_space<vmem>>, vector<196x768xf32>
    tpu.vector_store %arg4[%c0_5, %c0_6], %6 {strides = array<i32>} : memref<196x768xf32, #tpu.memory_space<vmem>>, vector<196x768xf32>,
    return
  }
  func.func @transform_0(%arg0: i32) -> (i32, i32) {
    %c0_i32 = arith.constant 0 : i32
    %c0_i32_0 = arith.constant 0 : i32
    %c0_i32_1 = arith.constant 0 : i32
    return %c0_i32, %c0_i32_0 : i32, i32
  }
  func.func @transform_1(%arg0: i32) -> (i32, i32) {
    %c0_i32 = arith.constant 0 : i32
    %c0_i32_0 = arith.constant 0 : i32
    return %c0_i32, %arg0 : i32, i32
  }
  func.func @transform_2(%arg0: i32) -> (i32, i32) {
    %c0_i32 = arith.constant 0 : i32
    %c0_i32_0 = arith.constant 0 : i32
    return %c0_i32, %arg0 : i32, i32
  }
  func.func @transform_3(%arg0: i32) -> (i32, i32) {
    %c0_i32 = arith.constant 0 : i32
    %c0_i32_0 = arith.constant 0 : i32
    return %c0_i32, %arg0 : i32, i32
  }
}

</mosaic_0001>

<llo_original>
// kernel: tpu_custom_call.1
$region0: #{tpu_custom_call.1}
  #allocation0 [shape = 'u32[]', space=smem, size = 0x4, offset = 0x4, fixed_abs, tag = 'smem constant byte address 0x4 - core index']
  #allocation1 [shape = 'u32[144,128]{1,0:T(1,128)}', space=vmem, size = 0x12000, scoped, tag = 'internal scratch']
  %s0 = inlined_call_operand.hbm [shape: f32[196,384], index: 0, kind: input, shape index: {}]
  %s1 = inlined_call_operand.hbm [shape: bf16[384,1536], index: 1, kind: input, shape index: {}]
  %s2 = inlined_call_operand.hbm [shape: f32[1,1536], index: 2, kind: input, shape index: {}]
  %s3 = inlined_call_operand.hbm [shape: f32[196,1536], index: 3, kind: output, shape index: {}]
  %s4 = sld [smem:[#allocation0]]
  $region57: #{tpu_custom_call.1} parent=0
    _
  %s6 = ssub.s32 1, %s4
  %s7 = scalar_select 0, %s6, %s4
  $region1: #{tpu_custom_call.1} parent=0
    #allocation2 [shape = 'u8[307200]{0}', space=vmem, size = 0x4b000, scoped, tag = 'input window, operand 0, single buffered']
    #allocation3 [shape = 's32[2]{0}', space=sflag, size = 0x8, scoped, tag = 'scoped memory for tpu_custom_call.1']
    #allocation4 [shape = 's32[2]{0}', space=sflag, size = 0x8, scoped, tag = 'scoped memory for tpu_custom_call.1']
    #allocation5 [shape = 'u8[1179648]{0}', space=vmem, size = 0x120000, scoped, tag = 'input window, operand 1']
    #allocation6 [shape = 's32[2]{0}', space=sflag, size = 0x8, scoped, tag = 'scoped memory for tpu_custom_call.1']
    #allocation7 [shape = 'u8[6144]{0}', space=vmem, size = 0x1800, scoped, tag = 'input window, operand 2']
    #allocation8 [shape = 'u8[1228800]{0}', space=vmem, size = 0x12c000, scoped, tag = 'output window, operand 0']
    %8 = vsyncpa [#allocation3], 0
    %9 = vsyncpa [#allocation6], 0
    %s10 = scalar_lea.sflag [#allocation6], 1
    %11 = vsyncpa %s10, 0
    %12 = vsyncpa [#allocation4], 0
    %s13 = scalar_lea.sflag [#allocation4], 1
    %14 = vsyncpa %s13, 0
    loop: start=0, step=1, limit=4
    $region2: #{tpu_custom_call.1} parent=1 // loop_pre_header
      _
    $region3: #{tpu_custom_call.1} parent=1 // loop_header
      %s16 = sphi 0, %s20
      %p17 = scmp.ge.s32.totalorder %s16, 4
      %s24 = sphi 0, %s24
      %s26 = sphi 0, %s24
      %s27 = sphi 0, %s26
      %s41 = sphi 0, %s27
      %s47 = sphi 0, %s49
      %s50 = sphi 0, %s47
      %s51 = sphi 0, %s50
      %s67 = sphi 0, %s51
      %s73 = sphi 0, %s75
      %s76 = sphi 0, %s73
      %s77 = sphi 0, %s76
      %s93 = sphi 0, %s77
      %s99 = sphi 0, %s101
      %s102 = sphi 0, %s99
      %s103 = sphi 0, %s102
      %s119 = sphi 0, %s103
    $region4: #{tpu_custom_call.1} parent=1 // loop_header_branch
      %19 = sbr.rel (%p17) target = $region8
    $region5: #{tpu_custom_call.1} parent=1 // loop_body
      %s21 = ssub.s32 %s16, 1
      %s22 = ssub.s32 %s16, 2
      %s23 = sadd.s32 %s16, 1
      %s25 = sadd.s32 %s24, 1
      %p28 = scmp.eq.s32.totalorder %s16, 1
      %p29 = scmp.ne.s32.totalorder %s24, %s26
      %p30 = scmp.eq.s32.totalorder %s16, 0
      %p31 = por %p29, %p30
      %p32 = scmp.ne.s32.totalorder %s24, %s26
      %p33 = scmp.eq.s32.totalorder %s21, 1
      %p34 = por %p32, %p33
      %p35 = scmp.ne.s32.totalorder %s26, %s27
      %p36 = scmp.eq.s32.totalorder %s21, 0
      %p37 = por %p35, %p36
      %p38 = scmp.ne.s32.totalorder %s26, %s27
      %p39 = scmp.eq.s32.totalorder %s22, 1
      %p40 = por %p38, %p39
      %p42 = scmp.ne.s32.totalorder %s27, %s41
      %p43 = scmp.eq.s32.totalorder %s22, 0
      %p44 = por %p42, %p43
      %s45 = ssub.s32 %s16, %s23
      %p46 = scmp.eq.s32.totalorder %s45, 0
      %s48 = sadd.s32 %s47, 1
      %s49 = scalar_select %p46, %s47, %s48
      %p52 = pneg %p46
      %p53 = scmp.eq.s32.totalorder %s16, 1
      %p54 = por %p52, %p53
      %p55 = scmp.ne.s32.totalorder %s47, %s50
      %p56 = scmp.eq.s32.totalorder %s16, 0
      %p57 = por %p55, %p56
      %p58 = scmp.ne.s32.totalorder %s47, %s50
      %p59 = scmp.eq.s32.totalorder %s21, 1
      %p60 = por %p58, %p59
      %p61 = scmp.ne.s32.totalorder %s50, %s51
      %p62 = scmp.eq.s32.totalorder %s21, 0
      %p63 = por %p61, %p62
      %p64 = scmp.ne.s32.totalorder %s50, %s51
      %p65 = scmp.eq.s32.totalorder %s22, 1
      %p66 = por %p64, %p65
      %p68 = scmp.ne.s32.totalorder %s51, %s67
      %p69 = scmp.eq.s32.totalorder %s22, 0
      %p70 = por %p68, %p69
      %s71 = ssub.s32 %s16, %s23
      %p72 = scmp.eq.s32.totalorder %s71, 0
      %s74 = sadd.s32 %s73, 1
      %s75 = scalar_select %p72, %s73, %s74
      %p78 = pneg %p72
      %p79 = scmp.eq.s32.totalorder %s16, 1
      %p80 = por %p78, %p79
      %p81 = scmp.ne.s32.totalorder %s73, %s76
      %p82 = scmp.eq.s32.totalorder %s16, 0
      %p83 = por %p81, %p82
      %p84 = scmp.ne.s32.totalorder %s73, %s76
      %p85 = scmp.eq.s32.totalorder %s21, 1
      %p86 = por %p84, %p85
      %p87 = scmp.ne.s32.totalorder %s76, %s77
      %p88 = scmp.eq.s32.totalorder %s21, 0
      %p89 = por %p87, %p88
      %p90 = scmp.ne.s32.totalorder %s76, %s77
      %p91 = scmp.eq.s32.totalorder %s22, 1
      %p92 = por %p90, %p91
      %p94 = scmp.ne.s32.totalorder %s77, %s93
      %p95 = scmp.eq.s32.totalorder %s22, 0
      %p96 = por %p94, %p95
      %s97 = ssub.s32 %s16, %s23
      %p98 = scmp.eq.s32.totalorder %s97, 0
      %s100 = sadd.s32 %s99, 1
      %s101 = scalar_select %p98, %s99, %s100
      %p104 = pneg %p98
      %p105 = scmp.eq.s32.totalorder %s16, 1
      %p106 = por %p104, %p105
      %p107 = scmp.ne.s32.totalorder %s99, %s102
      %p108 = scmp.eq.s32.totalorder %s16, 0
      %p109 = por %p107, %p108
      %p110 = scmp.ne.s32.totalorder %s99, %s102
      %p111 = scmp.eq.s32.totalorder %s21, 1
      %p112 = por %p110, %p111
      %p113 = scmp.ne.s32.totalorder %s102, %s103
      %p114 = scmp.eq.s32.totalorder %s21, 0
      %p115 = por %p113, %p114
      %p116 = scmp.ne.s32.totalorder %s102, %s103
      %p117 = scmp.eq.s32.totalorder %s22, 1
      %p118 = por %p116, %p117
      %p120 = scmp.ne.s32.totalorder %s103, %s119
      %p121 = scmp.eq.s32.totalorder %s22, 0
      %p122 = por %p120, %p121
      %p123 = scmp.le.s32.totalorder 1, %s16
      %p124 = scmp.lt.s32.totalorder %s16, 3
      %p125 = pnand %p123, %p124
      %p126 = pneg %p125
      // Predicated region
      $region9: #{tpu_custom_call.1} parent=5 // pred_check
        _
      $region10: #{tpu_custom_call.1} parent=5 // pred_check_branch
        %128 = sbr.rel (%p125) target = $region12
      $region11: #{tpu_custom_call.1} parent=5 // pred_region
        %s129 = ssub.s32 %s16, 1
        // Predicated region
        $region13: #{tpu_custom_call.1} parent=11 // pred_check
          %p130 = pneg %p37
        $region14: #{tpu_custom_call.1} parent=11 // pred_check_branch
          %132 = sbr.rel (%p130) target = $region16
        $region15: #{tpu_custom_call.1} parent=11 // pred_region
          %s134 = ssub.s32 9600, 9600
          %135 = vsyncadd [#allocation3], %s134
          %s136 = sshll.u32 [#allocation2], 4
          %s137 = int_to_ptr.vmem [resolvable:$true] %s136
          %142 = dma.hbm_to_vmem [thread:$0]  %s0, 9600, %s137, [#allocation3], 384, 384, 24
        $region16: #{tpu_custom_call.1} parent=11 // pred_fallthru
          _
      $region12: #{tpu_custom_call.1} parent=5 // pred_fallthru
        _
      %p143 = scmp.lt.s32.totalorder %s16, 2
      // Predicated region
      $region17: #{tpu_custom_call.1} parent=5 // pred_check
        %p144 = pneg %p143
      $region18: #{tpu_custom_call.1} parent=5 // pred_check_branch
        %146 = sbr.rel (%p144) target = $region20
      $region19: #{tpu_custom_call.1} parent=5 // pred_region
        // Predicated region
        $region21: #{tpu_custom_call.1} parent=19 // pred_check
          %p147 = pneg %p57
        $region22: #{tpu_custom_call.1} parent=19 // pred_check_branch
          %149 = sbr.rel (%p147) target = $region24
        $region23: #{tpu_custom_call.1} parent=19 // pred_region
          %s150 = sand.u32 %s16, 1
          %s151 = scalar_lea.sflag [#allocation6], %s150
          %s152 = sand.u32 %s47, 1
          %s153 = smul.addr %s152, 1152
          %s154 = scalar_lea.vmem [#allocation5], %s153
          %s155 = smul.u32 6, %s16
          %s157 = ssub.s32 18432, 18432
          %158 = vsyncadd %s151, %s157
          %s159 = smul.addr %s155, 64
          %s160 = scalar_lea.hbm %s1, %s159
          %s161 = sshll.u32 %s154, 4
          %s162 = int_to_ptr.vmem [resolvable:$true] %s161
          %167 = dma.hbm_to_vmem [thread:$0]  %s160, 18432, %s162, %s151, 768, 384, 24
        $region24: #{tpu_custom_call.1} parent=19 // pred_fallthru
          _
        // Predicated region
        $region25: #{tpu_custom_call.1} parent=19 // pred_check
          %p168 = pneg %p83
        $region26: #{tpu_custom_call.1} parent=19 // pred_check_branch
          %170 = sbr.rel (%p168) target = $region28
        $region27: #{tpu_custom_call.1} parent=19 // pred_region
          %s171 = sand.u32 %s16, 1
          %s172 = scalar_lea.sflag [#allocation6], %s171
          %s173 = sand.u32 %s73, 1
          %s174 = smul.addr %s173, 6
          %s175 = scalar_lea.vmem [#allocation7], %s174
          %s176 = smul.u32 6, %s16
          %s178 = ssub.s32 96, 96
          %179 = vsyncadd %s172, %s178
          %s180 = smul.addr %s176, 16
          %s181 = scalar_lea.hbm %s2, %s180
          %s183 = sshll.u32 %s175, 4
          %s184 = int_to_ptr.vmem [resolvable:$true] %s183
          %186 = dma.hbm_to_vmem [thread:$0]  %s181, 96, %s184, %s172
        $region28: #{tpu_custom_call.1} parent=19 // pred_fallthru
          _
      $region20: #{tpu_custom_call.1} parent=5 // pred_fallthru
        _
      %p187 = scmp.le.s32.totalorder 1, %s16
      %p188 = scmp.lt.s32.totalorder %s16, 3
      %p189 = pnand %p187, %p188
      %p190 = pneg %p189
      // Predicated region
      $region29: #{tpu_custom_call.1} parent=5 // pred_check
        _
      $region30: #{tpu_custom_call.1} parent=5 // pred_check_branch
        %192 = sbr.rel (%p189) target = $region32
      $region31: #{tpu_custom_call.1} parent=5 // pred_region
        %s193 = ssub.s32 %s16, 1
        // Predicated region
        $region33: #{tpu_custom_call.1} parent=31 // pred_check
          %p194 = pneg %p37
        $region34: #{tpu_custom_call.1} parent=31 // pred_check_branch
          %196 = sbr.rel (%p194) target = $region36
        $region35: #{tpu_custom_call.1} parent=31 // pred_region
          %197 = dma.done [#allocation3], 9600
        $region36: #{tpu_custom_call.1} parent=31 // pred_fallthru
          _
        %s198 = sand.u32 %s21, 1
        %s199 = scalar_lea.sflag [#allocation6], %s198
        %s200 = sand.u32 %s50, 1
        %s201 = smul.addr %s200, 1152
        %s202 = scalar_lea.vmem [#allocation5], %s201
        // Predicated region
        $region37: #{tpu_custom_call.1} parent=31 // pred_check
          %p203 = pneg %p63
        $region38: #{tpu_custom_call.1} parent=31 // pred_check_branch
          %205 = sbr.rel (%p203) target = $region40
        $region39: #{tpu_custom_call.1} parent=31 // pred_region
          %206 = dma.done %s199, 18432
        $region40: #{tpu_custom_call.1} parent=31 // pred_fallthru
          _
        %s207 = sand.u32 %s21, 1
        %s208 = scalar_lea.sflag [#allocation6], %s207
        %s209 = sand.u32 %s76, 1
        %s210 = smul.addr %s209, 6
        %s211 = scalar_lea.vmem [#allocation7], %s210
        // Predicated region
        $region41: #{tpu_custom_call.1} parent=31 // pred_check
          %p212 = pneg %p89
        $region42: #{tpu_custom_call.1} parent=31 // pred_check_branch
          %214 = sbr.rel (%p212) target = $region44
        $region43: #{tpu_custom_call.1} parent=31 // pred_region
          %215 = dma.done %s208, 96
        $region44: #{tpu_custom_call.1} parent=31 // pred_fallthru
          _
        %p216 = pneg %p37
        %p217 = pneg %p34
        %s218 = sand.u32 %s21, 1
        %s219 = scalar_lea.sflag [#allocation6], %s218
        %s220 = sand.u32 %s50, 1
        %s221 = smul.addr %s220, 1152
        %s222 = scalar_lea.vmem [#allocation5], %s221
        %p223 = pneg %p63
        %p224 = pneg %p60
        %s225 = sand.u32 %s21, 1
        %s226 = scalar_lea.sflag [#allocation6], %s225
        %s227 = sand.u32 %s76, 1
        %s228 = smul.addr %s227, 6
        %s229 = scalar_lea.vmem [#allocation7], %s228
        %p230 = pneg %p89
        %p231 = pneg %p86
        %p232 = pneg %p115
        %p233 = pneg %p112
        %s234 = sand.u32 %s102, 1
        %s235 = scalar_lea.sflag [#allocation4], %s234
        %s236 = sand.u32 %s102, 1
        %s237 = smul.addr %s236, 1200
        %s238 = scalar_lea.vmem [#allocation8], %s237
        %s239 = smul.u32 6, %s21
        %s240 = smul.u32 6, %s21
        %s241 = smul.u32 6, %s21
        %v243 = vld [vmem:[%s202] sm:$0xff]
        %v244 = vld [vmem:[%s202 + $0x8] sm:$0xff]
        %v245 = vld [vmem:[%s202 + $0x10] sm:$0xff]
        %v246 = vld [vmem:[%s202 + $0x18] sm:$0xff]
        %v247 = vld [vmem:[%s202 + $0x20] sm:$0xff]
        %v248 = vld [vmem:[%s202 + $0x28] sm:$0xff]
        %v249 = vld [vmem:[%s202 + $0x30] sm:$0xff]
        %v250 = vld [vmem:[%s202 + $0x38] sm:$0xff]
        %v251 = vld [vmem:[%s202 + $0x40] sm:$0xff]
        %v252 = vld [vmem:[%s202 + $0x48] sm:$0xff]
        %v253 = vld [vmem:[%s202 + $0x50] sm:$0xff]
        %v254 = vld [vmem:[%s202 + $0x58] sm:$0xff]
        %v255 = vld [vmem:[%s202 + $0x60] sm:$0xff]
        %v256 = vld [vmem:[%s202 + $0x68] sm:$0xff]
        %v257 = vld [vmem:[%s202 + $0x70] sm:$0xff]
        %v258 = vld [vmem:[%s202 + $0x78] sm:$0xff]
        %v259 = vld [vmem:[%s202 + $0x80] sm:$0xff]
        %v260 = vld [vmem:[%s202 + $0x88] sm:$0xff]
        %v261 = vld [vmem:[%s202 + $0x90] sm:$0xff]
        %v262 = vld [vmem:[%s202 + $0x98] sm:$0xff]
        %v263 = vld [vmem:[%s202 + $0xa0] sm:$0xff]
        %v264 = vld [vmem:[%s202 + $0xa8] sm:$0xff]
        %v265 = vld [vmem:[%s202 + $0xb0] sm:$0xff]
        %v266 = vld [vmem:[%s202 + $0xb8] sm:$0xff]
        %v267 = vld [vmem:[%s202 + $0xc0] sm:$0xff]
        %v268 = vld [vmem:[%s202 + $0xc8] sm:$0xff]
        %v269 = vld [vmem:[%s202 + $0xd0] sm:$0xff]
        %v270 = vld [vmem:[%s202 + $0xd8] sm:$0xff]
        %v271 = vld [vmem:[%s202 + $0xe0] sm:$0xff]
        %v272 = vld [vmem:[%s202 + $0xe8] sm:$0xff]
        %v273 = vld [vmem:[%s202 + $0xf0] sm:$0xff]
        %v274 = vld [vmem:[%s202 + $0xf8] sm:$0xff]
        %v275 = vld [vmem:[%s202 + $0x100] sm:$0xff]
        %v276 = vld [vmem:[%s202 + $0x108] sm:$0xff]
        %v277 = vld [vmem:[%s202 + $0x110] sm:$0xff]
        %v278 = vld [vmem:[%s202 + $0x118] sm:$0xff]
        %v279 = vld [vmem:[%s202 + $0x120] sm:$0xff]
        %v280 = vld [vmem:[%s202 + $0x128] sm:$0xff]
        %v281 = vld [vmem:[%s202 + $0x130] sm:$0xff]
        %v282 = vld [vmem:[%s202 + $0x138] sm:$0xff]
        %v283 = vld [vmem:[%s202 + $0x140] sm:$0xff]
        %v284 = vld [vmem:[%s202 + $0x148] sm:$0xff]
        %v285 = vld [vmem:[%s202 + $0x150] sm:$0xff]
        %v286 = vld [vmem:[%s202 + $0x158] sm:$0xff]
        %v287 = vld [vmem:[%s202 + $0x160] sm:$0xff]
        %v288 = vld [vmem:[%s202 + $0x168] sm:$0xff]
        %v289 = vld [vmem:[%s202 + $0x170] sm:$0xff]
        %v290 = vld [vmem:[%s202 + $0x178] sm:$0xff]
        %v291 = vld [vmem:[%s202 + $0x180] sm:$0xff]
        %v292 = vld [vmem:[%s202 + $0x188] sm:$0xff]
        %v293 = vld [vmem:[%s202 + $0x190] sm:$0xff]
        %v294 = vld [vmem:[%s202 + $0x198] sm:$0xff]
        %v295 = vld [vmem:[%s202 + $0x1a0] sm:$0xff]
        %v296 = vld [vmem:[%s202 + $0x1a8] sm:$0xff]
        %v297 = vld [vmem:[%s202 + $0x1b0] sm:$0xff]
        %v298 = vld [vmem:[%s202 + $0x1b8] sm:$0xff]
        %v299 = vld [vmem:[%s202 + $0x1c0] sm:$0xff]
        %v300 = vld [vmem:[%s202 + $0x1c8] sm:$0xff]
        %v301 = vld [vmem:[%s202 + $0x1d0] sm:$0xff]
        %v302 = vld [vmem:[%s202 + $0x1d8] sm:$0xff]
        %v303 = vld [vmem:[%s202 + $0x1e0] sm:$0xff]
        %v304 = vld [vmem:[%s202 + $0x1e8] sm:$0xff]
        %v305 = vld [vmem:[%s202 + $0x1f0] sm:$0xff]
        %v306 = vld [vmem:[%s202 + $0x1f8] sm:$0xff]
        %v307 = vld [vmem:[%s202 + $0x200] sm:$0xff]
        %v308 = vld [vmem:[%s202 + $0x208] sm:$0xff]
        %v309 = vld [vmem:[%s202 + $0x210] sm:$0xff]
        %v310 = vld [vmem:[%s202 + $0x218] sm:$0xff]
        %v311 = vld [vmem:[%s202 + $0x220] sm:$0xff]
        %v312 = vld [vmem:[%s202 + $0x228] sm:$0xff]
        %v313 = vld [vmem:[%s202 + $0x230] sm:$0xff]
        %v314 = vld [vmem:[%s202 + $0x238] sm:$0xff]
        %v315 = vld [vmem:[%s202 + $0x240] sm:$0xff]
        %v316 = vld [vmem:[%s202 + $0x248] sm:$0xff]
        %v317 = vld [vmem:[%s202 + $0x250] sm:$0xff]
        %v318 = vld [vmem:[%s202 + $0x258] sm:$0xff]
        %v319 = vld [vmem:[%s202 + $0x260] sm:$0xff]
        %v320 = vld [vmem:[%s202 + $0x268] sm:$0xff]
        %v321 = vld [vmem:[%s202 + $0x270] sm:$0xff]
        %v322 = vld [vmem:[%s202 + $0x278] sm:$0xff]
        %v323 = vld [vmem:[%s202 + $0x280] sm:$0xff]
        %v324 = vld [vmem:[%s202 + $0x288] sm:$0xff]
        %v325 = vld [vmem:[%s202 + $0x290] sm:$0xff]
        %v326 = vld [vmem:[%s202 + $0x298] sm:$0xff]
        %v327 = vld [vmem:[%s202 + $0x2a0] sm:$0xff]
        %v328 = vld [vmem:[%s202 + $0x2a8] sm:$0xff]
        %v329 = vld [vmem:[%s202 + $0x2b0] sm:$0xff]
        %v330 = vld [vmem:[%s202 + $0x2b8] sm:$0xff]
        %v331 = vld [vmem:[%s202 + $0x2c0] sm:$0xff]
        %v332 = vld [vmem:[%s202 + $0x2c8] sm:$0xff]
        %v333 = vld [vmem:[%s202 + $0x2d0] sm:$0xff]
        %v334 = vld [vmem:[%s202 + $0x2d8] sm:$0xff]
        %v335 = vld [vmem:[%s202 + $0x2e0] sm:$0xff]
        %v336 = vld [vmem:[%s202 + $0x2e8] sm:$0xff]
        %v337 = vld [vmem:[%s202 + $0x2f0] sm:$0xff]
        %v338 = vld [vmem:[%s202 + $0x2f8] sm:$0xff]
        %v339 = vld [vmem:[%s202 + $0x300] sm:$0xff]
        %v340 = vld [vmem:[%s202 + $0x308] sm:$0xff]
        %v341 = vld [vmem:[%s202 + $0x310] sm:$0xff]
        %v342 = vld [vmem:[%s202 + $0x318] sm:$0xff]
        %v343 = vld [vmem:[%s202 + $0x320] sm:$0xff]
        %v344 = vld [vmem:[%s202 + $0x328] sm:$0xff]
        %v345 = vld [vmem:[%s202 + $0x330] sm:$0xff]
        %v346 = vld [vmem:[%s202 + $0x338] sm:$0xff]
        %v347 = vld [vmem:[%s202 + $0x340] sm:$0xff]
        %v348 = vld [vmem:[%s202 + $0x348] sm:$0xff]
        %v349 = vld [vmem:[%s202 + $0x350] sm:$0xff]
        %v350 = vld [vmem:[%s202 + $0x358] sm:$0xff]
        %v351 = vld [vmem:[%s202 + $0x360] sm:$0xff]
        %v352 = vld [vmem:[%s202 + $0x368] sm:$0xff]
        %v353 = vld [vmem:[%s202 + $0x370] sm:$0xff]
        %v354 = vld [vmem:[%s202 + $0x378] sm:$0xff]
        %v355 = vld [vmem:[%s202 + $0x380] sm:$0xff]
        %v356 = vld [vmem:[%s202 + $0x388] sm:$0xff]
        %v357 = vld [vmem:[%s202 + $0x390] sm:$0xff]
        %v358 = vld [vmem:[%s202 + $0x398] sm:$0xff]
        %v359 = vld [vmem:[%s202 + $0x3a0] sm:$0xff]
        %v360 = vld [vmem:[%s202 + $0x3a8] sm:$0xff]
        %v361 = vld [vmem:[%s202 + $0x3b0] sm:$0xff]
        %v362 = vld [vmem:[%s202 + $0x3b8] sm:$0xff]
        %v363 = vld [vmem:[%s202 + $0x3c0] sm:$0xff]
        %v364 = vld [vmem:[%s202 + $0x3c8] sm:$0xff]
        %v365 = vld [vmem:[%s202 + $0x3d0] sm:$0xff]
        %v366 = vld [vmem:[%s202 + $0x3d8] sm:$0xff]
        %v367 = vld [vmem:[%s202 + $0x3e0] sm:$0xff]
        %v368 = vld [vmem:[%s202 + $0x3e8] sm:$0xff]
        %v369 = vld [vmem:[%s202 + $0x3f0] sm:$0xff]
        %v370 = vld [vmem:[%s202 + $0x3f8] sm:$0xff]
        %v371 = vld [vmem:[%s202 + $0x400] sm:$0xff]
        %v372 = vld [vmem:[%s202 + $0x408] sm:$0xff]
        %v373 = vld [vmem:[%s202 + $0x410] sm:$0xff]
        %v374 = vld [vmem:[%s202 + $0x418] sm:$0xff]
        %v375 = vld [vmem:[%s202 + $0x420] sm:$0xff]
        %v376 = vld [vmem:[%s202 + $0x428] sm:$0xff]
        %v377 = vld [vmem:[%s202 + $0x430] sm:$0xff]
        %v378 = vld [vmem:[%s202 + $0x438] sm:$0xff]
        %v379 = vld [vmem:[%s202 + $0x440] sm:$0xff]
        %v380 = vld [vmem:[%s202 + $0x448] sm:$0xff]
        %v381 = vld [vmem:[%s202 + $0x450] sm:$0xff]
        %v382 = vld [vmem:[%s202 + $0x458] sm:$0xff]
        %v383 = vld [vmem:[%s202 + $0x460] sm:$0xff]
        %v384 = vld [vmem:[%s202 + $0x468] sm:$0xff]
        %v385 = vld [vmem:[%s202 + $0x470] sm:$0xff]
        %v386 = vld [vmem:[%s202 + $0x478] sm:$0xff]
        %v387 = vld [vmem:[#allocation2] sm:$0xff]
        %v388 = vld [vmem:[#allocation2 + $0x8] sm:$0xff]
        %v389 = vld [vmem:[#allocation2 + $0x10] sm:$0xff]
        %v390 = vld [vmem:[#allocation2 + $0x18] sm:$0xff]
        %v391 = vld [vmem:[#allocation2 + $0x20] sm:$0xff]
        %v392 = vld [vmem:[#allocation2 + $0x28] sm:$0xff]
        %v393 = vld [vmem:[#allocation2 + $0x30] sm:$0xff]
        %v394 = vld [vmem:[#allocation2 + $0x38] sm:$0xff]
        %v395 = vld [vmem:[#allocation2 + $0x40] sm:$0xff]
        %v396 = vld [vmem:[#allocation2 + $0x48] sm:$0xff]
        %v397 = vld [vmem:[#allocation2 + $0x50] sm:$0xff]
        %v398 = vld [vmem:[#allocation2 + $0x58] sm:$0xff]
        %v399 = vld [vmem:[#allocation2 + $0x60] sm:$0xff]
        %v400 = vld [vmem:[#allocation2 + $0x68] sm:$0xff]
        %v401 = vld [vmem:[#allocation2 + $0x70] sm:$0xff]
        %v402 = vld [vmem:[#allocation2 + $0x78] sm:$0xff]
        %v403 = vld [vmem:[#allocation2 + $0x80] sm:$0xff]
        %v404 = vld [vmem:[#allocation2 + $0x88] sm:$0xff]
        %v405 = vld [vmem:[#allocation2 + $0x90] sm:$0xff]
        %v406 = vld [vmem:[#allocation2 + $0x98] sm:$0xff]
        %v407 = vld [vmem:[#allocation2 + $0xa0] sm:$0xff]
        %v408 = vld [vmem:[#allocation2 + $0xa8] sm:$0xff]
        %v409 = vld [vmem:[#allocation2 + $0xb0] sm:$0xff]
        %v410 = vld [vmem:[#allocation2 + $0xb8] sm:$0xff]
        %v411 = vld [vmem:[#allocation2 + $0xc0] sm:$0xff]
        %v412 = vld [vmem:[#allocation2 + $0xc8] sm:$0xff]
        %v413 = vld [vmem:[#allocation2 + $0xd0] sm:$0xff]
        %v414 = vld [vmem:[#allocation2 + $0xd8] sm:$0xff]
        %v415 = vld [vmem:[#allocation2 + $0xe0] sm:$0xff]
        %v416 = vld [vmem:[#allocation2 + $0xe8] sm:$0xff]
        %v417 = vld [vmem:[#allocation2 + $0xf0] sm:$0xff]
        %v418 = vld [vmem:[#allocation2 + $0xf8] sm:$0xff]
        %v419 = vld [vmem:[#allocation2 + $0x100] sm:$0xff]
        %v420 = vld [vmem:[#allocation2 + $0x108] sm:$0xff]
        %v421 = vld [vmem:[#allocation2 + $0x110] sm:$0xff]
        %v422 = vld [vmem:[#allocation2 + $0x118] sm:$0xff]
        %v423 = vld [vmem:[#allocation2 + $0x120] sm:$0xff]
        %v424 = vld [vmem:[#allocation2 + $0x128] sm:$0xff]
        %v425 = vld [vmem:[#allocation2 + $0x130] sm:$0xff]
        %v426 = vld [vmem:[#allocation2 + $0x138] sm:$0xff]
        %v427 = vld [vmem:[#allocation2 + $0x140] sm:$0xff]
        %v428 = vld [vmem:[#allocation2 + $0x148] sm:$0xff]
        %v429 = vld [vmem:[#allocation2 + $0x150] sm:$0xff]
        %v430 = vld [vmem:[#allocation2 + $0x158] sm:$0xff]
        %v431 = vld [vmem:[#allocation2 + $0x160] sm:$0xff]
        %v432 = vld [vmem:[#allocation2 + $0x168] sm:$0xff]
        %v433 = vld [vmem:[#allocation2 + $0x170] sm:$0xff]
        %v434 = vld [vmem:[#allocation2 + $0x178] sm:$0xff]
        %v435 = vld [vmem:[#allocation2 + $0x180] sm:$0xff]
        %v436 = vld [vmem:[#allocation2 + $0x188] sm:$0xff]
        %v437 = vld [vmem:[#allocation2 + $0x190] sm:$0xff]
        %v438 = vld [vmem:[#allocation2 + $0x198] sm:$0xff]
        %v439 = vld [vmem:[#allocation2 + $0x1a0] sm:$0xff]
        %v440 = vld [vmem:[#allocation2 + $0x1a8] sm:$0xff]
        %v441 = vld [vmem:[#allocation2 + $0x1b0] sm:$0xff]
        %v442 = vld [vmem:[#allocation2 + $0x1b8] sm:$0xff]
        %v443 = vld [vmem:[#allocation2 + $0x1c0] sm:$0xff]
        %v444 = vld [vmem:[#allocation2 + $0x1c8] sm:$0xff]
        %v445 = vld [vmem:[#allocation2 + $0x1d0] sm:$0xff]
        %v446 = vld [vmem:[#allocation2 + $0x1d8] sm:$0xff]
        %v447 = vld [vmem:[#allocation2 + $0x1e0] sm:$0xff]
        %v448 = vld [vmem:[#allocation2 + $0x1e8] sm:$0xff]
        %v449 = vld [vmem:[#allocation2 + $0x1f0] sm:$0xff]
        %v450 = vld [vmem:[#allocation2 + $0x1f8] sm:$0xff]
        %v451 = vld [vmem:[#allocation2 + $0x200] sm:$0xff]
        %v452 = vld [vmem:[#allocation2 + $0x208] sm:$0xff]
        %v453 = vld [vmem:[#allocation2 + $0x210] sm:$0xff]
        %v454 = vld [vmem:[#allocation2 + $0x218] sm:$0xff]
        %v455 = vld [vmem:[#allocation2 + $0x220] sm:$0xff]
        %v456 = vld [vmem:[#allocation2 + $0x228] sm:$0xff]
        %v457 = vld [vmem:[#allocation2 + $0x230] sm:$0xff]
        %v458 = vld [vmem:[#allocation2 + $0x238] sm:$0xff]
        %v459 = vld [vmem:[#allocation2 + $0x240] sm:$0xf]
        %v460 = vld [vmem:[#allocation2 + $0x248] sm:$0xf]
        %v461 = vld [vmem:[#allocation2 + $0x250] sm:$0xf]
        %v462 = vpack.c.bf16 %v390, %v387
        %v463 = vpack.c.bf16 %v391, %v388
        %v464 = vpack.c.bf16 %v392, %v389
        %v465 = vpack.c.bf16 %v396, %v393
        %v466 = vpack.c.bf16 %v397, %v394
        %v467 = vpack.c.bf16 %v398, %v395
        %v468 = vpack.c.bf16 %v402, %v399
        %v469 = vpack.c.bf16 %v403, %v400
        %v470 = vpack.c.bf16 %v404, %v401
        %v471 = vpack.c.bf16 %v408, %v405
        %v472 = vpack.c.bf16 %v409, %v406
        %v473 = vpack.c.bf16 %v410, %v407
        %v474 = vpack.c.bf16 %v414, %v411
        %v475 = vpack.c.bf16 %v415, %v412
        %v476 = vpack.c.bf16 %v416, %v413
        %v477 = vpack.c.bf16 %v420, %v417
        %v478 = vpack.c.bf16 %v421, %v418
        %v479 = vpack.c.bf16 %v422, %v419
        %v480 = vpack.c.bf16 %v426, %v423
        %v481 = vpack.c.bf16 %v427, %v424
        %v482 = vpack.c.bf16 %v428, %v425
        %v483 = vpack.c.bf16 %v432, %v429
        %v484 = vpack.c.bf16 %v433, %v430
        %v485 = vpack.c.bf16 %v434, %v431
        %v486 = vpack.c.bf16 %v438, %v435
        %v487 = vpack.c.bf16 %v439, %v436
        %v488 = vpack.c.bf16 %v440, %v437
        %v489 = vpack.c.bf16 %v444, %v441
        %v490 = vpack.c.bf16 %v445, %v442
        %v491 = vpack.c.bf16 %v446, %v443
        %v492 = vpack.c.bf16 %v450, %v447
        %v493 = vpack.c.bf16 %v451, %v448
        %v494 = vpack.c.bf16 %v452, %v449
        %v495 = vpack.c.bf16 %v456, %v453
        %v496 = vpack.c.bf16 %v457, %v454
        %v497 = vpack.c.bf16 %v458, %v455
        %v498 = vpack.c.bf16 %v459, %v459
        %v499 = vpack.c.bf16 %v460, %v460
        %v500 = vpack.c.bf16 %v461, %v461
        %v501 = vld [vmem:[%s211] sm:$0x3f]
        %v503 = vlaneseq
        %v504 = vshrl.u32 %v503, 7
        %v505 = vsub.s32 0, %v504
        %v506 = vrot.slane %v501, %v505
        %v507 = vlaneseq
        %v508 = vshrl.u32 %v507, 7
        %v509 = vsub.s32 1, %v508
        %v510 = vrot.slane %v501, %v509
        %v511 = vlaneseq
        %v512 = vshrl.u32 %v511, 7
        %v513 = vsub.s32 2, %v512
        %v514 = vrot.slane %v501, %v513
        %v515 = vlaneseq
        %v516 = vshrl.u32 %v515, 7
        %v517 = vsub.s32 3, %v516
        %v518 = vrot.slane %v501, %v517
        %v519 = vlaneseq
        %v520 = vshrl.u32 %v519, 7
        %v521 = vsub.s32 4, %v520
        %v522 = vrot.slane %v501, %v521
        %v523 = vlaneseq
        %v524 = vshrl.u32 %v523, 7
        %v525 = vsub.s32 5, %v524
        %v526 = vrot.slane %v501, %v525
        %v677 = vunpack.c.l.b16 %v243
        %v678 = vunpack.c.h.b16 %v243
        %v679 = vunpack.c.l.b16 %v244
        %v680 = vunpack.c.h.b16 %v244
        %v681 = vunpack.c.l.b16 %v245
        %v682 = vunpack.c.h.b16 %v245
        %v683 = vunpack.c.l.b16 %v246
        %v684 = vunpack.c.h.b16 %v246
        %v685 = vunpack.c.l.b16 %v247
        %v686 = vunpack.c.h.b16 %v247
        %v687 = vunpack.c.l.b16 %v248
        %v688 = vunpack.c.h.b16 %v248
        %v689 = vunpack.c.l.b16 %v249
        %v690 = vunpack.c.h.b16 %v249
        %v691 = vunpack.c.l.b16 %v250
        %v692 = vunpack.c.h.b16 %v250
        %v693 = vunpack.c.l.b16 %v251
        %v694 = vunpack.c.h.b16 %v251
        %v695 = vunpack.c.l.b16 %v252
        %v696 = vunpack.c.h.b16 %v252
        %v697 = vunpack.c.l.b16 %v253
        %v698 = vunpack.c.h.b16 %v253
        %v699 = vunpack.c.l.b16 %v254
        %v700 = vunpack.c.h.b16 %v254
        %v701 = vunpack.c.l.b16 %v255
        %v702 = vunpack.c.h.b16 %v255
        %v703 = vunpack.c.l.b16 %v256
        %v704 = vunpack.c.h.b16 %v256
        %v705 = vunpack.c.l.b16 %v257
        %v706 = vunpack.c.h.b16 %v257
        %v707 = vunpack.c.l.b16 %v258
        %v708 = vunpack.c.h.b16 %v258
        %v709 = vunpack.c.l.b16 %v259
        %v710 = vunpack.c.h.b16 %v259
        %v711 = vunpack.c.l.b16 %v260
        %v712 = vunpack.c.h.b16 %v260
        %v713 = vunpack.c.l.b16 %v261
        %v714 = vunpack.c.h.b16 %v261
        %v715 = vunpack.c.l.b16 %v262
        %v716 = vunpack.c.h.b16 %v262
        %v717 = vunpack.c.l.b16 %v263
        %v718 = vunpack.c.h.b16 %v263
        %v719 = vunpack.c.l.b16 %v264
        %v720 = vunpack.c.h.b16 %v264
        %v721 = vunpack.c.l.b16 %v265
        %v722 = vunpack.c.h.b16 %v265
        %v723 = vunpack.c.l.b16 %v266
        %v724 = vunpack.c.h.b16 %v266
        %v725 = vunpack.c.l.b16 %v267
        %v726 = vunpack.c.h.b16 %v267
        %v727 = vunpack.c.l.b16 %v268
        %v728 = vunpack.c.h.b16 %v268
        %v729 = vunpack.c.l.b16 %v269
        %v730 = vunpack.c.h.b16 %v269
        %v731 = vunpack.c.l.b16 %v270
        %v732 = vunpack.c.h.b16 %v270
        %v733 = vunpack.c.l.b16 %v271
        %v734 = vunpack.c.h.b16 %v271
        %v735 = vunpack.c.l.b16 %v272
        %v736 = vunpack.c.h.b16 %v272
        %v737 = vunpack.c.l.b16 %v273
        %v738 = vunpack.c.h.b16 %v273
        %v739 = vunpack.c.l.b16 %v274
        %v740 = vunpack.c.h.b16 %v274
        %v741 = vunpack.c.l.b16 %v275
        %v742 = vunpack.c.h.b16 %v275
        %v743 = vunpack.c.l.b16 %v276
        %v744 = vunpack.c.h.b16 %v276
        %v745 = vunpack.c.l.b16 %v277
        %v746 = vunpack.c.h.b16 %v277
        %v747 = vunpack.c.l.b16 %v278
        %v748 = vunpack.c.h.b16 %v278
        %v749 = vunpack.c.l.b16 %v279
        %v750 = vunpack.c.h.b16 %v279
        %v751 = vunpack.c.l.b16 %v280
        %v752 = vunpack.c.h.b16 %v280
        %v753 = vunpack.c.l.b16 %v281
        %v754 = vunpack.c.h.b16 %v281
        %v755 = vunpack.c.l.b16 %v282
        %v756 = vunpack.c.h.b16 %v282
        %v757 = vunpack.c.l.b16 %v283
        %v758 = vunpack.c.h.b16 %v283
        %v759 = vunpack.c.l.b16 %v284
        %v760 = vunpack.c.h.b16 %v284
        %v761 = vunpack.c.l.b16 %v285
        %v762 = vunpack.c.h.b16 %v285
        %v763 = vunpack.c.l.b16 %v286
        %v764 = vunpack.c.h.b16 %v286
        %v765 = vunpack.c.l.b16 %v287
        %v766 = vunpack.c.h.b16 %v287
        %v767 = vunpack.c.l.b16 %v288
        %v768 = vunpack.c.h.b16 %v288
        %v769 = vunpack.c.l.b16 %v289
        %v770 = vunpack.c.h.b16 %v289
        %v771 = vunpack.c.l.b16 %v290
        %v772 = vunpack.c.h.b16 %v290
        %v773 = vunpack.c.l.b16 %v291
        %v774 = vunpack.c.h.b16 %v291
        %v775 = vunpack.c.l.b16 %v292
        %v776 = vunpack.c.h.b16 %v292
        %v777 = vunpack.c.l.b16 %v293
        %v778 = vunpack.c.h.b16 %v293
        %v779 = vunpack.c.l.b16 %v294
        %v780 = vunpack.c.h.b16 %v294
        %v781 = vunpack.c.l.b16 %v295
        %v782 = vunpack.c.h.b16 %v295
        %v783 = vunpack.c.l.b16 %v296
        %v784 = vunpack.c.h.b16 %v296
        %v785 = vunpack.c.l.b16 %v297
        %v786 = vunpack.c.h.b16 %v297
        %v787 = vunpack.c.l.b16 %v298
        %v788 = vunpack.c.h.b16 %v298
        %v789 = vunpack.c.l.b16 %v299
        %v790 = vunpack.c.h.b16 %v299
        %v791 = vunpack.c.l.b16 %v300
        %v792 = vunpack.c.h.b16 %v300
        %v793 = vunpack.c.l.b16 %v301
        %v794 = vunpack.c.h.b16 %v301
        %v795 = vunpack.c.l.b16 %v302
        %v796 = vunpack.c.h.b16 %v302
        %v797 = vunpack.c.l.b16 %v303
        %v798 = vunpack.c.h.b16 %v303
        %v799 = vunpack.c.l.b16 %v304
        %v800 = vunpack.c.h.b16 %v304
        %v801 = vunpack.c.l.b16 %v305
        %v802 = vunpack.c.h.b16 %v305
        %v803 = vunpack.c.l.b16 %v306
        %v804 = vunpack.c.h.b16 %v306
        %v805 = vunpack.c.l.b16 %v307
        %v806 = vunpack.c.h.b16 %v307
        %v807 = vunpack.c.l.b16 %v308
        %v808 = vunpack.c.h.b16 %v308
        %v809 = vunpack.c.l.b16 %v309
        %v810 = vunpack.c.h.b16 %v309
        %v811 = vunpack.c.l.b16 %v310
        %v812 = vunpack.c.h.b16 %v310
        %v813 = vunpack.c.l.b16 %v311
        %v814 = vunpack.c.h.b16 %v311
        %v815 = vunpack.c.l.b16 %v312
        %v816 = vunpack.c.h.b16 %v312
        %v817 = vunpack.c.l.b16 %v313
        %v818 = vunpack.c.h.b16 %v313
        %v819 = vunpack.c.l.b16 %v314
        %v820 = vunpack.c.h.b16 %v314
        %v821 = vunpack.c.l.b16 %v315
        %v822 = vunpack.c.h.b16 %v315
        %v823 = vunpack.c.l.b16 %v316
        %v824 = vunpack.c.h.b16 %v316
        %v825 = vunpack.c.l.b16 %v317
        %v826 = vunpack.c.h.b16 %v317
        %v827 = vunpack.c.l.b16 %v318
        %v828 = vunpack.c.h.b16 %v318
        %v829 = vunpack.c.l.b16 %v319
        %v830 = vunpack.c.h.b16 %v319
        %v831 = vunpack.c.l.b16 %v320
        %v832 = vunpack.c.h.b16 %v320
        %v833 = vunpack.c.l.b16 %v321
        %v834 = vunpack.c.h.b16 %v321
        %v835 = vunpack.c.l.b16 %v322
        %v836 = vunpack.c.h.b16 %v322
        %v837 = vunpack.c.l.b16 %v323
        %v838 = vunpack.c.h.b16 %v323
        %v839 = vunpack.c.l.b16 %v324
        %v840 = vunpack.c.h.b16 %v324
        %v841 = vunpack.c.l.b16 %v325
        %v842 = vunpack.c.h.b16 %v325
        %v843 = vunpack.c.l.b16 %v326
        %v844 = vunpack.c.h.b16 %v326
        %v845 = vunpack.c.l.b16 %v327
        %v846 = vunpack.c.h.b16 %v327
        %v847 = vunpack.c.l.b16 %v328
        %v848 = vunpack.c.h.b16 %v328
        %v849 = vunpack.c.l.b16 %v329
        %v850 = vunpack.c.h.b16 %v329
        %v851 = vunpack.c.l.b16 %v330
        %v852 = vunpack.c.h.b16 %v330
        %v853 = vunpack.c.l.b16 %v331
        %v854 = vunpack.c.h.b16 %v331
        %v855 = vunpack.c.l.b16 %v332
        %v856 = vunpack.c.h.b16 %v332
        %v857 = vunpack.c.l.b16 %v333
        %v858 = vunpack.c.h.b16 %v333
        %v859 = vunpack.c.l.b16 %v334
        %v860 = vunpack.c.h.b16 %v334
        %v861 = vunpack.c.l.b16 %v335
        %v862 = vunpack.c.h.b16 %v335
        %v863 = vunpack.c.l.b16 %v336
        %v864 = vunpack.c.h.b16 %v336
        %v865 = vunpack.c.l.b16 %v337
        %v866 = vunpack.c.h.b16 %v337
        %v867 = vunpack.c.l.b16 %v338
        %v868 = vunpack.c.h.b16 %v338
        %v869 = vunpack.c.l.b16 %v339
        %v870 = vunpack.c.h.b16 %v339
        %v871 = vunpack.c.l.b16 %v340
        %v872 = vunpack.c.h.b16 %v340
        %v873 = vunpack.c.l.b16 %v341
        %v874 = vunpack.c.h.b16 %v341
        %v875 = vunpack.c.l.b16 %v342
        %v876 = vunpack.c.h.b16 %v342
        %v877 = vunpack.c.l.b16 %v343
        %v878 = vunpack.c.h.b16 %v343
        %v879 = vunpack.c.l.b16 %v344
        %v880 = vunpack.c.h.b16 %v344
        %v881 = vunpack.c.l.b16 %v345
        %v882 = vunpack.c.h.b16 %v345
        %v883 = vunpack.c.l.b16 %v346
        %v884 = vunpack.c.h.b16 %v346
        %v885 = vunpack.c.l.b16 %v347
        %v886 = vunpack.c.h.b16 %v347
        %v887 = vunpack.c.l.b16 %v348
        %v888 = vunpack.c.h.b16 %v348
        %v889 = vunpack.c.l.b16 %v349
        %v890 = vunpack.c.h.b16 %v349
        %v891 = vunpack.c.l.b16 %v350
        %v892 = vunpack.c.h.b16 %v350
        %v893 = vunpack.c.l.b16 %v351
        %v894 = vunpack.c.h.b16 %v351
        %v895 = vunpack.c.l.b16 %v352
        %v896 = vunpack.c.h.b16 %v352
        %v897 = vunpack.c.l.b16 %v353
        %v898 = vunpack.c.h.b16 %v353
        %v899 = vunpack.c.l.b16 %v354
        %v900 = vunpack.c.h.b16 %v354
        %v901 = vunpack.c.l.b16 %v355
        %v902 = vunpack.c.h.b16 %v355
        %v903 = vunpack.c.l.b16 %v356
        %v904 = vunpack.c.h.b16 %v356
        %v905 = vunpack.c.l.b16 %v357
        %v906 = vunpack.c.h.b16 %v357
        %v907 = vunpack.c.l.b16 %v358
        %v908 = vunpack.c.h.b16 %v358
        %v909 = vunpack.c.l.b16 %v359
        %v910 = vunpack.c.h.b16 %v359
        %v911 = vunpack.c.l.b16 %v360
        %v912 = vunpack.c.h.b16 %v360
        %v913 = vunpack.c.l.b16 %v361
        %v914 = vunpack.c.h.b16 %v361
        %v915 = vunpack.c.l.b16 %v362
        %v916 = vunpack.c.h.b16 %v362
        %v917 = vunpack.c.l.b16 %v363
        %v918 = vunpack.c.h.b16 %v363
        %v919 = vunpack.c.l.b16 %v364
        %v920 = vunpack.c.h.b16 %v364
        %v921 = vunpack.c.l.b16 %v365
        %v922 = vunpack.c.h.b16 %v365
        %v923 = vunpack.c.l.b16 %v366
        %v924 = vunpack.c.h.b16 %v366
        %v925 = vunpack.c.l.b16 %v367
        %v926 = vunpack.c.h.b16 %v367
        %v927 = vunpack.c.l.b16 %v368
        %v928 = vunpack.c.h.b16 %v368
        %v929 = vunpack.c.l.b16 %v369
        %v930 = vunpack.c.h.b16 %v369
        %v931 = vunpack.c.l.b16 %v370
        %v932 = vunpack.c.h.b16 %v370
        %v933 = vunpack.c.l.b16 %v371
        %v934 = vunpack.c.h.b16 %v371
        %v935 = vunpack.c.l.b16 %v372
        %v936 = vunpack.c.h.b16 %v372
        %v937 = vunpack.c.l.b16 %v373
        %v938 = vunpack.c.h.b16 %v373
        %v939 = vunpack.c.l.b16 %v374
        %v940 = vunpack.c.h.b16 %v374
        %v941 = vunpack.c.l.b16 %v375
        %v942 = vunpack.c.h.b16 %v375
        %v943 = vunpack.c.l.b16 %v376
        %v944 = vunpack.c.h.b16 %v376
        %v945 = vunpack.c.l.b16 %v377
        %v946 = vunpack.c.h.b16 %v377
        %v947 = vunpack.c.l.b16 %v378
        %v948 = vunpack.c.h.b16 %v378
        %v949 = vunpack.c.l.b16 %v379
        %v950 = vunpack.c.h.b16 %v379
        %v951 = vunpack.c.l.b16 %v380
        %v952 = vunpack.c.h.b16 %v380
        %v953 = vunpack.c.l.b16 %v381
        %v954 = vunpack.c.h.b16 %v381
        %v955 = vunpack.c.l.b16 %v382
        %v956 = vunpack.c.h.b16 %v382
        %v957 = vunpack.c.l.b16 %v383
        %v958 = vunpack.c.h.b16 %v383
        %v959 = vunpack.c.l.b16 %v384
        %v960 = vunpack.c.h.b16 %v384
        %v961 = vunpack.c.l.b16 %v385
        %v962 = vunpack.c.h.b16 %v385
        %v963 = vunpack.c.l.b16 %v386
        %v964 = vunpack.c.h.b16 %v386
        %v965 = vpack.c.b16 %v683, %v677
        %v966 = vpack.c.b16 %v684, %v678
        %v967 = vpack.c.b16 %v685, %v679
        %v968 = vpack.c.b16 %v686, %v680
        %v969 = vpack.c.b16 %v687, %v681
        %v970 = vpack.c.b16 %v688, %v682
        %v971 = vpack.c.b16 %v695, %v689
        %v972 = vpack.c.b16 %v696, %v690
        %v973 = vpack.c.b16 %v697, %v691
        %v974 = vpack.c.b16 %v698, %v692
        %v975 = vpack.c.b16 %v699, %v693
        %v976 = vpack.c.b16 %v700, %v694
        %v977 = vpack.c.b16 %v707, %v701
        %v978 = vpack.c.b16 %v708, %v702
        %v979 = vpack.c.b16 %v709, %v703
        %v980 = vpack.c.b16 %v710, %v704
        %v981 = vpack.c.b16 %v711, %v705
        %v982 = vpack.c.b16 %v712, %v706
        %v983 = vpack.c.b16 %v719, %v713
        %v984 = vpack.c.b16 %v720, %v714
        %v985 = vpack.c.b16 %v721, %v715
        %v986 = vpack.c.b16 %v722, %v716
        %v987 = vpack.c.b16 %v723, %v717
        %v988 = vpack.c.b16 %v724, %v718
        %v989 = vpack.c.b16 %v731, %v725
        %v990 = vpack.c.b16 %v732, %v726
        %v991 = vpack.c.b16 %v733, %v727
        %v992 = vpack.c.b16 %v734, %v728
        %v993 = vpack.c.b16 %v735, %v729
        %v994 = vpack.c.b16 %v736, %v730
        %v995 = vpack.c.b16 %v743, %v737
        %v996 = vpack.c.b16 %v744, %v738
        %v997 = vpack.c.b16 %v745, %v739
        %v998 = vpack.c.b16 %v746, %v740
        %v999 = vpack.c.b16 %v747, %v741
        %v1000 = vpack.c.b16 %v748, %v742
        %v1001 = vpack.c.b16 %v755, %v749
        %v1002 = vpack.c.b16 %v756, %v750
        %v1003 = vpack.c.b16 %v757, %v751
        %v1004 = vpack.c.b16 %v758, %v752
        %v1005 = vpack.c.b16 %v759, %v753
        %v1006 = vpack.c.b16 %v760, %v754
        %v1007 = vpack.c.b16 %v767, %v761
        %v1008 = vpack.c.b16 %v768, %v762
        %v1009 = vpack.c.b16 %v769, %v763
        %v1010 = vpack.c.b16 %v770, %v764
        %v1011 = vpack.c.b16 %v771, %v765
        %v1012 = vpack.c.b16 %v772, %v766
        %v1013 = vpack.c.b16 %v779, %v773
        %v1014 = vpack.c.b16 %v780, %v774
        %v1015 = vpack.c.b16 %v781, %v775
        %v1016 = vpack.c.b16 %v782, %v776
        %v1017 = vpack.c.b16 %v783, %v777
        %v1018 = vpack.c.b16 %v784, %v778
        %v1019 = vpack.c.b16 %v791, %v785
        %v1020 = vpack.c.b16 %v792, %v786
        %v1021 = vpack.c.b16 %v793, %v787
        %v1022 = vpack.c.b16 %v794, %v788
        %v1023 = vpack.c.b16 %v795, %v789
        %v1024 = vpack.c.b16 %v796, %v790
        %v1025 = vpack.c.b16 %v803, %v797
        %v1026 = vpack.c.b16 %v804, %v798
        %v1027 = vpack.c.b16 %v805, %v799
        %v1028 = vpack.c.b16 %v806, %v800
        %v1029 = vpack.c.b16 %v807, %v801
        %v1030 = vpack.c.b16 %v808, %v802
        %v1031 = vpack.c.b16 %v815, %v809
        %v1032 = vpack.c.b16 %v816, %v810
        %v1033 = vpack.c.b16 %v817, %v811
        %v1034 = vpack.c.b16 %v818, %v812
        %v1035 = vpack.c.b16 %v819, %v813
        %v1036 = vpack.c.b16 %v820, %v814
        %v1037 = vpack.c.b16 %v827, %v821
        %v1038 = vpack.c.b16 %v828, %v822
        %v1039 = vpack.c.b16 %v829, %v823
        %v1040 = vpack.c.b16 %v830, %v824
        %v1041 = vpack.c.b16 %v831, %v825
        %v1042 = vpack.c.b16 %v832, %v826
        %v1043 = vpack.c.b16 %v839, %v833
        %v1044 = vpack.c.b16 %v840, %v834
        %v1045 = vpack.c.b16 %v841, %v835
        %v1046 = vpack.c.b16 %v842, %v836
        %v1047 = vpack.c.b16 %v843, %v837
        %v1048 = vpack.c.b16 %v844, %v838
        %v1049 = vpack.c.b16 %v851, %v845
        %v1050 = vpack.c.b16 %v852, %v846
        %v1051 = vpack.c.b16 %v853, %v847
        %v1052 = vpack.c.b16 %v854, %v848
        %v1053 = vpack.c.b16 %v855, %v849
        %v1054 = vpack.c.b16 %v856, %v850
        %v1055 = vpack.c.b16 %v863, %v857
        %v1056 = vpack.c.b16 %v864, %v858
        %v1057 = vpack.c.b16 %v865, %v859
        %v1058 = vpack.c.b16 %v866, %v860
        %v1059 = vpack.c.b16 %v867, %v861
        %v1060 = vpack.c.b16 %v868, %v862
        %v1061 = vpack.c.b16 %v875, %v869
        %v1062 = vpack.c.b16 %v876, %v870
        %v1063 = vpack.c.b16 %v877, %v871
        %v1064 = vpack.c.b16 %v878, %v872
        %v1065 = vpack.c.b16 %v879, %v873
        %v1066 = vpack.c.b16 %v880, %v874
        %v1067 = vpack.c.b16 %v887, %v881
        %v1068 = vpack.c.b16 %v888, %v882
        %v1069 = vpack.c.b16 %v889, %v883
        %v1070 = vpack.c.b16 %v890, %v884
        %v1071 = vpack.c.b16 %v891, %v885
        %v1072 = vpack.c.b16 %v892, %v886
        %v1073 = vpack.c.b16 %v899, %v893
        %v1074 = vpack.c.b16 %v900, %v894
        %v1075 = vpack.c.b16 %v901, %v895
        %v1076 = vpack.c.b16 %v902, %v896
        %v1077 = vpack.c.b16 %v903, %v897
        %v1078 = vpack.c.b16 %v904, %v898
        %v1079 = vpack.c.b16 %v911, %v905
        %v1080 = vpack.c.b16 %v912, %v906
        %v1081 = vpack.c.b16 %v913, %v907
        %v1082 = vpack.c.b16 %v914, %v908
        %v1083 = vpack.c.b16 %v915, %v909
        %v1084 = vpack.c.b16 %v916, %v910
        %v1085 = vpack.c.b16 %v923, %v917
        %v1086 = vpack.c.b16 %v924, %v918
        %v1087 = vpack.c.b16 %v925, %v919
        %v1088 = vpack.c.b16 %v926, %v920
        %v1089 = vpack.c.b16 %v927, %v921
        %v1090 = vpack.c.b16 %v928, %v922
        %v1091 = vpack.c.b16 %v935, %v929
        %v1092 = vpack.c.b16 %v936, %v930
        %v1093 = vpack.c.b16 %v937, %v931
        %v1094 = vpack.c.b16 %v938, %v932
        %v1095 = vpack.c.b16 %v939, %v933
        %v1096 = vpack.c.b16 %v940, %v934
        %v1097 = vpack.c.b16 %v947, %v941
        %v1098 = vpack.c.b16 %v948, %v942
        %v1099 = vpack.c.b16 %v949, %v943
        %v1100 = vpack.c.b16 %v950, %v944
        %v1101 = vpack.c.b16 %v951, %v945
        %v1102 = vpack.c.b16 %v952, %v946
        %v1103 = vpack.c.b16 %v959, %v953
        %v1104 = vpack.c.b16 %v960, %v954
        %v1105 = vpack.c.b16 %v961, %v955
        %v1106 = vpack.c.b16 %v962, %v956
        %v1107 = vpack.c.b16 %v963, %v957
        %v1108 = vpack.c.b16 %v964, %v958
        %1253 = vmatprep.subr.bf16.mxu0 %v966
        %1254 = vmatpush1.bf16.msra.mxu0 %v965
        %1255 = vmatprep.subr.bf16.mxu0 %v972
        %1256 = vmatpush1.bf16.msra.mxu0 %v971
        %1257 = vmatprep.subr.bf16.mxu0 %v978
        %1258 = vmatpush1.bf16.msra.mxu0 %v977
        %1259 = vmatprep.subr.bf16.mxu0 %v984
        %1260 = vmatpush1.bf16.msra.mxu0 %v983
        %1261 = vmatprep.subr.bf16.mxu0 %v990
        %1262 = vmatpush1.bf16.msra.mxu0 %v989
        %1263 = vmatprep.subr.bf16.mxu0 %v996
        %1264 = vmatpush1.bf16.msra.mxu0 %v995
        %1265 = vmatprep.subr.bf16.mxu0 %v1002
        %1266 = vmatpush1.bf16.msra.mxu0 %v1001
        %1267 = vmatprep.subr.bf16.mxu0 %v1008
        %1268 = vmatpush1.bf16.msra.mxu0 %v1007
        %1269 = vmatprep.subr.bf16.mxu0 %v1014
        %1270 = vmatpush1.bf16.msra.mxu0 %v1013
        %1271 = vmatprep.subr.bf16.mxu0 %v1020
        %1272 = vmatpush1.bf16.msra.mxu0 %v1019
        %1273 = vmatprep.subr.bf16.mxu0 %v1026
        %1274 = vmatpush1.bf16.msra.mxu0 %v1025
        %1275 = vmatprep.subr.bf16.mxu0 %v1032
        %1276 = vmatpush1.bf16.msra.mxu0 %v1031
        %1277 = vmatprep.subr.bf16.mxu0 %v1038
        %1278 = vmatpush1.bf16.msra.mxu0 %v1037
        %1279 = vmatprep.subr.bf16.mxu0 %v1044
        %1280 = vmatpush1.bf16.msra.mxu0 %v1043
        %1281 = vmatprep.subr.bf16.mxu0 %v1050
        %1282 = vmatpush1.bf16.msra.mxu0 %v1049
        %1283 = vmatprep.subr.bf16.mxu0 %v1056
        %1284 = vmatpush1.bf16.msra.mxu0 %v1055
        %1285 = vmatprep.mubr.bf16.mxu0 %v463
        %1286 = vmatmul.mubr.bf16.gmra.mrb[0].mxu0 %v462
        %v1287 = vpop.f32.mrb[0].mxu0
        %v1288 = vadd.f32 %v506, %v1287
        %v1289 = vpop.f32.mrb[0].mxu0
        %v1290 = vadd.f32 %v510, %v1289
        %v1291 = vpop.f32.mrb[0].mxu0
        %v1292 = vadd.f32 %v506, %v1291
        %v1293 = vpop.f32.mrb[0].mxu0
        %v1294 = vadd.f32 %v510, %v1293
        %1295 = vmatprep.mubr.bf16.mxu0 %v466
        %1296 = vmatmul.mubr.bf16.gmra.mrb[0].mxu0 %v465
        %v1297 = vpop.f32.mrb[0].mxu0
        %v1298 = vadd.f32 %v506, %v1297
        %v1299 = vpop.f32.mrb[0].mxu0
        %v1300 = vadd.f32 %v510, %v1299
        %v1301 = vpop.f32.mrb[0].mxu0
        %v1302 = vadd.f32 %v506, %v1301
        %v1303 = vpop.f32.mrb[0].mxu0
        %v1304 = vadd.f32 %v510, %v1303
        %1305 = vmatprep.mubr.bf16.mxu0 %v469
        %1306 = vmatmul.mubr.bf16.gmra.mrb[0].mxu0 %v468
        %v1307 = vpop.f32.mrb[0].mxu0
        %v1308 = vadd.f32 %v506, %v1307
        %v1309 = vpop.f32.mrb[0].mxu0
        %v1310 = vadd.f32 %v510, %v1309
        %v1311 = vpop.f32.mrb[0].mxu0
        %v1312 = vadd.f32 %v506, %v1311
        %v1313 = vpop.f32.mrb[0].mxu0
        %v1314 = vadd.f32 %v510, %v1313
        %1315 = vmatprep.mubr.bf16.mxu0 %v472
        %1316 = vmatmul.mubr.bf16.gmra.mrb[0].mxu0 %v471
        %v1317 = vpop.f32.mrb[0].mxu0
        %v1318 = vadd.f32 %v506, %v1317
        %v1319 = vpop.f32.mrb[0].mxu0
        %v1320 = vadd.f32 %v510, %v1319
        %v1321 = vpop.f32.mrb[0].mxu0
        %v1322 = vadd.f32 %v506, %v1321
        %v1323 = vpop.f32.mrb[0].mxu0
        %v1324 = vadd.f32 %v510, %v1323
        %1325 = vmatprep.mubr.bf16.mxu0 %v475
        %1326 = vmatmul.mubr.bf16.gmra.mrb[0].mxu0 %v474
        %v1327 = vpop.f32.mrb[0].mxu0
        %v1328 = vadd.f32 %v506, %v1327
        %v1329 = vpop.f32.mrb[0].mxu0
        %v1330 = vadd.f32 %v510, %v1329
        %v1331 = vpop.f32.mrb[0].mxu0
        %v1332 = vadd.f32 %v506, %v1331
        %v1333 = vpop.f32.mrb[0].mxu0
        %v1334 = vadd.f32 %v510, %v1333
        %1335 = vmatprep.mubr.bf16.mxu0 %v478
        %1336 = vmatmul.mubr.bf16.gmra.mrb[0].mxu0 %v477
        %v1337 = vpop.f32.mrb[0].mxu0
        %v1338 = vadd.f32 %v506, %v1337
        %v1339 = vpop.f32.mrb[0].mxu0
        %v1340 = vadd.f32 %v510, %v1339
        %v1341 = vpop.f32.mrb[0].mxu0
        %v1342 = vadd.f32 %v506, %v1341
        %v1343 = vpop.f32.mrb[0].mxu0
        %v1344 = vadd.f32 %v510, %v1343
        %1345 = vmatprep.mubr.bf16.mxu0 %v481
        %1346 = vmatmul.mubr.bf16.gmra.mrb[0].mxu0 %v480
        %v1347 = vpop.f32.mrb[0].mxu0
        %v1348 = vadd.f32 %v506, %v1347
        %v1349 = vpop.f32.mrb[0].mxu0
        %v1350 = vadd.f32 %v510, %v1349
        %v1351 = vpop.f32.mrb[0].mxu0
        %v1352 = vadd.f32 %v506, %v1351
        %v1353 = vpop.f32.mrb[0].mxu0
        %v1354 = vadd.f32 %v510, %v1353
        %1355 = vmatprep.mubr.bf16.mxu0 %v484
        %1356 = vmatmul.mubr.bf16.gmra.mrb[0].mxu0 %v483
        %v1357 = vpop.f32.mrb[0].mxu0
        %v1358 = vadd.f32 %v506, %v1357
        %v1359 = vpop.f32.mrb[0].mxu0
        %v1360 = vadd.f32 %v510, %v1359
        %v1361 = vpop.f32.mrb[0].mxu0
        %v1362 = vadd.f32 %v506, %v1361
        %v1363 = vpop.f32.mrb[0].mxu0
        %v1364 = vadd.f32 %v510, %v1363
        %1365 = vmatprep.mubr.bf16.mxu0 %v487
        %1366 = vmatmul.mubr.bf16.gmra.mrb[0].mxu0 %v486
        %v1367 = vpop.f32.mrb[0].mxu0
        %v1368 = vadd.f32 %v506, %v1367
        %v1369 = vpop.f32.mrb[0].mxu0
        %v1370 = vadd.f32 %v510, %v1369
        %v1371 = vpop.f32.mrb[0].mxu0
        %v1372 = vadd.f32 %v506, %v1371
        %v1373 = vpop.f32.mrb[0].mxu0
        %v1374 = vadd.f32 %v510, %v1373
        %1375 = vmatprep.mubr.bf16.mxu0 %v490
        %1376 = vmatmul.mubr.bf16.gmra.mrb[0].mxu0 %v489
        %v1377 = vpop.f32.mrb[0].mxu0
        %v1378 = vadd.f32 %v506, %v1377
        %v1379 = vpop.f32.mrb[0].mxu0
        %v1380 = vadd.f32 %v510, %v1379
        %v1381 = vpop.f32.mrb[0].mxu0
        %v1382 = vadd.f32 %v506, %v1381
        %v1383 = vpop.f32.mrb[0].mxu0
        %v1384 = vadd.f32 %v510, %v1383
        %1385 = vmatprep.mubr.bf16.mxu0 %v493
        %1386 = vmatmul.mubr.bf16.gmra.mrb[0].mxu0 %v492
        %v1387 = vpop.f32.mrb[0].mxu0
        %v1388 = vadd.f32 %v506, %v1387
        %v1389 = vpop.f32.mrb[0].mxu0
        %v1390 = vadd.f32 %v510, %v1389
        %v1391 = vpop.f32.mrb[0].mxu0
        %v1392 = vadd.f32 %v506, %v1391
        %v1393 = vpop.f32.mrb[0].mxu0
        %v1394 = vadd.f32 %v510, %v1393
        %1395 = vmatprep.mubr.bf16.mxu0 %v496
        %1396 = vmatmul.mubr.bf16.gmra.mrb[0].mxu0 %v495
        %v1397 = vpop.f32.mrb[0].mxu0
        %v1398 = vadd.f32 %v506, %v1397
        %v1399 = vpop.f32.mrb[0].mxu0
        %v1400 = vadd.f32 %v510, %v1399
        %v1401 = vpop.f32.mrb[0].mxu0
        %v1402 = vadd.f32 %v506, %v1401
        %v1403 = vpop.f32.mrb[0].mxu0
        %v1404 = vadd.f32 %v510, %v1403
        %1405 = vmatprep.mubr.bf16.mxu0 %v499
        %1406 = vmatmul.mubr.bf16.gmra.mrb[0].mxu0 %v498
        %v1407 = vpop.f32.mrb[0].mxu0
        %v1408 = vadd.f32 %v506, %v1407
        %v1409 = vpop.f32.mrb[0].mxu0
        %v1410 = vadd.f32 %v510, %v1409
        %v1411 = vpop.f32.mrb[0].mxu0
        %v1412 = vpop.f32.mrb[0].mxu0
        %1413 = vdwg.mxu0
        %1414 = vmatprep.subr.bf16.mxu0 %v1062
        %1415 = vmatpush1.bf16.msra.mxu0 %v1061
        %1416 = vmatprep.subr.bf16.mxu0 %v1068
        %1417 = vmatpush1.bf16.msra.mxu0 %v1067
        %1418 = vmatprep.subr.bf16.mxu0 %v1074
        %1419 = vmatpush1.bf16.msra.mxu0 %v1073
        %1420 = vmatprep.subr.bf16.mxu0 %v1080
        %1421 = vmatpush1.bf16.msra.mxu0 %v1079
        %1422 = vmatprep.subr.bf16.mxu0 %v1086
        %1423 = vmatpush1.bf16.msra.mxu0 %v1085
        %1424 = vmatprep.subr.bf16.mxu0 %v1092
        %1425 = vmatpush1.bf16.msra.mxu0 %v1091
        %1426 = vmatprep.subr.bf16.mxu0 %v1098
        %1427 = vmatpush1.bf16.msra.mxu0 %v1097
        %1428 = vmatprep.subr.bf16.mxu0 %v1104
        %1429 = vmatpush1.bf16.msra.mxu0 %v1103
        %1430 = vmatprep.subr.bf16.mxu0 0
        %1431 = vmatpush1.bf16.msra.mxu0 0
        %1432 = vmatprep.subr.bf16.mxu0 0
        %1433 = vmatpush1.bf16.msra.mxu0 0
        %1434 = vmatprep.subr.bf16.mxu0 0
        %1435 = vmatpush1.bf16.msra.mxu0 0
        %1436 = vmatprep.subr.bf16.mxu0 0
        %1437 = vmatpush1.bf16.msra.mxu0 0
        %1438 = vmatprep.subr.bf16.mxu0 0
        %1439 = vmatpush1.bf16.msra.mxu0 0
        %1440 = vmatprep.subr.bf16.mxu0 0
        %1441 = vmatpush1.bf16.msra.mxu0 0
        %1442 = vmatprep.subr.bf16.mxu0 0
        %1443 = vmatpush1.bf16.msra.mxu0 0
        %1444 = vmatprep.subr.bf16.mxu0 0
        %1445 = vmatpush1.bf16.msra.mxu0 0
        %1446 = vmatprep.mubr.bf16.mxu0 0
        %1447 = vmatmul.mubr.bf16.gmra.mrb[0].mxu0 %v464
        %v1448 = vpop.f32.mrb[0].mxu0
        %v1449 = vadd.f32 %v1288, %v1448
        %v1450 = vpop.f32.mrb[0].mxu0
        %v1451 = vadd.f32 %v1290, %v1450
        %v1452 = vpop.f32.mrb[0].mxu0
        %v1453 = vadd.f32 %v1292, %v1452
        %v1454 = vpop.f32.mrb[0].mxu0
        %v1455 = vadd.f32 %v1294, %v1454
        %1456 = vmatprep.mubr.bf16.mxu0 0
        %1457 = vmatmul.mubr.bf16.gmra.mrb[0].mxu0 %v467
        %v1458 = vpop.f32.mrb[0].mxu0
        %v1459 = vadd.f32 %v1298, %v1458
        %v1460 = vpop.f32.mrb[0].mxu0
        %v1461 = vadd.f32 %v1300, %v1460
        %v1462 = vpop.f32.mrb[0].mxu0
        %v1463 = vadd.f32 %v1302, %v1462
        %v1464 = vpop.f32.mrb[0].mxu0
        %v1465 = vadd.f32 %v1304, %v1464
        %1466 = vmatprep.mubr.bf16.mxu0 0
        %1467 = vmatmul.mubr.bf16.gmra.mrb[0].mxu0 %v470
        %v1468 = vpop.f32.mrb[0].mxu0
        %v1469 = vadd.f32 %v1308, %v1468
        %v1470 = vpop.f32.mrb[0].mxu0
        %v1471 = vadd.f32 %v1310, %v1470
        %v1472 = vpop.f32.mrb[0].mxu0
        %v1473 = vadd.f32 %v1312, %v1472
        %v1474 = vpop.f32.mrb[0].mxu0
        %v1475 = vadd.f32 %v1314, %v1474
        %1476 = vmatprep.mubr.bf16.mxu0 0
        %1477 = vmatmul.mubr.bf16.gmra.mrb[0].mxu0 %v473
        %v1478 = vpop.f32.mrb[0].mxu0
        %v1479 = vadd.f32 %v1318, %v1478
        %v1480 = vpop.f32.mrb[0].mxu0
        %v1481 = vadd.f32 %v1320, %v1480
        %v1482 = vpop.f32.mrb[0].mxu0
        %v1483 = vadd.f32 %v1322, %v1482
        %v1484 = vpop.f32.mrb[0].mxu0
        %v1485 = vadd.f32 %v1324, %v1484
        %1486 = vmatprep.mubr.bf16.mxu0 0
        %1487 = vmatmul.mubr.bf16.gmra.mrb[0].mxu0 %v476
        %v1488 = vpop.f32.mrb[0].mxu0
        %v1489 = vadd.f32 %v1328, %v1488
        %v1490 = vpop.f32.mrb[0].mxu0
        %v1491 = vadd.f32 %v1330, %v1490
        %v1492 = vpop.f32.mrb[0].mxu0
        %v1493 = vadd.f32 %v1332, %v1492
        %v1494 = vpop.f32.mrb[0].mxu0
        %v1495 = vadd.f32 %v1334, %v1494
        %1496 = vmatprep.mubr.bf16.mxu0 0
        %1497 = vmatmul.mubr.bf16.gmra.mrb[0].mxu0 %v479
        %v1498 = vpop.f32.mrb[0].mxu0
        %v1499 = vadd.f32 %v1338, %v1498
        %v1500 = vpop.f32.mrb[0].mxu0
        %v1501 = vadd.f32 %v1340, %v1500
        %v1502 = vpop.f32.mrb[0].mxu0
        %v1503 = vadd.f32 %v1342, %v1502
        %v1504 = vpop.f32.mrb[0].mxu0
        %v1505 = vadd.f32 %v1344, %v1504
        %1506 = vmatprep.mubr.bf16.mxu0 0
        %1507 = vmatmul.mubr.bf16.gmra.mrb[0].mxu0 %v482
        %v1508 = vpop.f32.mrb[0].mxu0
        %v1509 = vadd.f32 %v1348, %v1508
        %v1510 = vpop.f32.mrb[0].mxu0
        %v1511 = vadd.f32 %v1350, %v1510
        %v1512 = vpop.f32.mrb[0].mxu0
        %v1513 = vadd.f32 %v1352, %v1512
        %v1514 = vpop.f32.mrb[0].mxu0
        %v1515 = vadd.f32 %v1354, %v1514
        %1516 = vmatprep.mubr.bf16.mxu0 0
        %1517 = vmatmul.mubr.bf16.gmra.mrb[0].mxu0 %v485
        %v1518 = vpop.f32.mrb[0].mxu0
        %v1519 = vadd.f32 %v1358, %v1518
        %v1520 = vpop.f32.mrb[0].mxu0
        %v1521 = vadd.f32 %v1360, %v1520
        %v1522 = vpop.f32.mrb[0].mxu0
        %v1523 = vadd.f32 %v1362, %v1522
        %v1524 = vpop.f32.mrb[0].mxu0
        %v1525 = vadd.f32 %v1364, %v1524
        %1526 = vmatprep.mubr.bf16.mxu0 0
        %1527 = vmatmul.mubr.bf16.gmra.mrb[0].mxu0 %v488
        %v1528 = vpop.f32.mrb[0].mxu0
        %v1529 = vadd.f32 %v1368, %v1528
        %v1530 = vpop.f32.mrb[0].mxu0
        %v1531 = vadd.f32 %v1370, %v1530
        %v1532 = vpop.f32.mrb[0].mxu0
        %v1533 = vadd.f32 %v1372, %v1532
        %v1534 = vpop.f32.mrb[0].mxu0
        %v1535 = vadd.f32 %v1374, %v1534
        %1536 = vmatprep.mubr.bf16.mxu0 0
        %1537 = vmatmul.mubr.bf16.gmra.mrb[0].mxu0 %v491
        %v1538 = vpop.f32.mrb[0].mxu0
        %v1539 = vadd.f32 %v1378, %v1538
        %v1540 = vpop.f32.mrb[0].mxu0
        %v1541 = vadd.f32 %v1380, %v1540
        %v1542 = vpop.f32.mrb[0].mxu0
        %v1543 = vadd.f32 %v1382, %v1542
        %v1544 = vpop.f32.mrb[0].mxu0
        %v1545 = vadd.f32 %v1384, %v1544
        %1546 = vmatprep.mubr.bf16.mxu0 0
        %1547 = vmatmul.mubr.bf16.gmra.mrb[0].mxu0 %v494
        %v1548 = vpop.f32.mrb[0].mxu0
        %v1549 = vadd.f32 %v1388, %v1548
        %v1550 = vpop.f32.mrb[0].mxu0
        %v1551 = vadd.f32 %v1390, %v1550
        %v1552 = vpop.f32.mrb[0].mxu0
        %v1553 = vadd.f32 %v1392, %v1552
        %v1554 = vpop.f32.mrb[0].mxu0
        %v1555 = vadd.f32 %v1394, %v1554
        %1556 = vmatprep.mubr.bf16.mxu0 0
        %1557 = vmatmul.mubr.bf16.gmra.mrb[0].mxu0 %v497
        %v1558 = vpop.f32.mrb[0].mxu0
        %v1559 = vadd.f32 %v1398, %v1558
        %v1560 = vpop.f32.mrb[0].mxu0
        %v1561 = vadd.f32 %v1400, %v1560
        %v1562 = vpop.f32.mrb[0].mxu0
        %v1563 = vadd.f32 %v1402, %v1562
        %v1564 = vpop.f32.mrb[0].mxu0
        %v1565 = vadd.f32 %v1404, %v1564
        %1566 = vmatprep.mubr.bf16.mxu0 0
        %1567 = vmatmul.mubr.bf16.gmra.mrb[0].mxu0 %v500
        %v1568 = vpop.f32.mrb[0].mxu0
        %v1569 = vadd.f32 %v1408, %v1568
        %v1570 = vpop.f32.mrb[0].mxu0
        %v1571 = vadd.f32 %v1410, %v1570
        %v1572 = vpop.f32.mrb[0].mxu0
        %v1573 = vpop.f32.mrb[0].mxu0
        %1574 = vdwg.mxu0
        %1575 = vmatprep.subr.bf16.mxu0 %v968
        %1576 = vmatpush1.bf16.msra.mxu0 %v967
        %1577 = vmatprep.subr.bf16.mxu0 %v974
        %1578 = vmatpush1.bf16.msra.mxu0 %v973
        %1579 = vmatprep.subr.bf16.mxu0 %v980
        %1580 = vmatpush1.bf16.msra.mxu0 %v979
        %1581 = vmatprep.subr.bf16.mxu0 %v986
        %1582 = vmatpush1.bf16.msra.mxu0 %v985
        %1583 = vmatprep.subr.bf16.mxu0 %v992
        %1584 = vmatpush1.bf16.msra.mxu0 %v991
        %1585 = vmatprep.subr.bf16.mxu0 %v998
        %1586 = vmatpush1.bf16.msra.mxu0 %v997
        %1587 = vmatprep.subr.bf16.mxu0 %v1004
        %1588 = vmatpush1.bf16.msra.mxu0 %v1003
        %1589 = vmatprep.subr.bf16.mxu0 %v1010
        %1590 = vmatpush1.bf16.msra.mxu0 %v1009
        %1591 = vmatprep.subr.bf16.mxu0 %v1016
        %1592 = vmatpush1.bf16.msra.mxu0 %v1015
        %1593 = vmatprep.subr.bf16.mxu0 %v1022
        %1594 = vmatpush1.bf16.msra.mxu0 %v1021
        %1595 = vmatprep.subr.bf16.mxu0 %v1028
        %1596 = vmatpush1.bf16.msra.mxu0 %v1027
        %1597 = vmatprep.subr.bf16.mxu0 %v1034
        %1598 = vmatpush1.bf16.msra.mxu0 %v1033
        %1599 = vmatprep.subr.bf16.mxu0 %v1040
        %1600 = vmatpush1.bf16.msra.mxu0 %v1039
        %1601 = vmatprep.subr.bf16.mxu0 %v1046
        %1602 = vmatpush1.bf16.msra.mxu0 %v1045
        %1603 = vmatprep.subr.bf16.mxu0 %v1052
        %1604 = vmatpush1.bf16.msra.mxu0 %v1051
        %1605 = vmatprep.subr.bf16.mxu0 %v1058
        %1606 = vmatpush1.bf16.msra.mxu0 %v1057
        %1607 = vmatprep.mubr.bf16.mxu0 %v463
        %1608 = vmatmul.mubr.bf16.gmra.mrb[0].mxu0 %v462
        %v1609 = vpop.f32.mrb[0].mxu0
        %v1610 = vadd.f32 %v514, %v1609
        %v1611 = vpop.f32.mrb[0].mxu0
        %v1612 = vadd.f32 %v518, %v1611
        %v1613 = vpop.f32.mrb[0].mxu0
        %v1614 = vadd.f32 %v514, %v1613
        %v1615 = vpop.f32.mrb[0].mxu0
        %v1616 = vadd.f32 %v518, %v1615
        %1617 = vmatprep.mubr.bf16.mxu0 %v466
        %1618 = vmatmul.mubr.bf16.gmra.mrb[0].mxu0 %v465
        %v1619 = vpop.f32.mrb[0].mxu0
        %v1620 = vadd.f32 %v514, %v1619
        %v1621 = vpop.f32.mrb[0].mxu0
        %v1622 = vadd.f32 %v518, %v1621
        %v1623 = vpop.f32.mrb[0].mxu0
        %v1624 = vadd.f32 %v514, %v1623
        %v1625 = vpop.f32.mrb[0].mxu0
        %v1626 = vadd.f32 %v518, %v1625
        %1627 = vmatprep.mubr.bf16.mxu0 %v469
        %1628 = vmatmul.mubr.bf16.gmra.mrb[0].mxu0 %v468
        %v1629 = vpop.f32.mrb[0].mxu0
        %v1630 = vadd.f32 %v514, %v1629
        %v1631 = vpop.f32.mrb[0].mxu0
        %v1632 = vadd.f32 %v518, %v1631
        %v1633 = vpop.f32.mrb[0].mxu0
        %v1634 = vadd.f32 %v514, %v1633
        %v1635 = vpop.f32.mrb[0].mxu0
        %v1636 = vadd.f32 %v518, %v1635
        %1637 = vmatprep.mubr.bf16.mxu0 %v472
        %1638 = vmatmul.mubr.bf16.gmra.mrb[0].mxu0 %v471
        %v1639 = vpop.f32.mrb[0].mxu0
        %v1640 = vadd.f32 %v514, %v1639
        %v1641 = vpop.f32.mrb[0].mxu0
        %v1642 = vadd.f32 %v518, %v1641
        %v1643 = vpop.f32.mrb[0].mxu0
        %v1644 = vadd.f32 %v514, %v1643
        %v1645 = vpop.f32.mrb[0].mxu0
        %v1646 = vadd.f32 %v518, %v1645
        %1647 = vmatprep.mubr.bf16.mxu0 %v475
        %1648 = vmatmul.mubr.bf16.gmra.mrb[0].mxu0 %v474
        %v1649 = vpop.f32.mrb[0].mxu0
        %v1650 = vadd.f32 %v514, %v1649
        %v1651 = vpop.f32.mrb[0].mxu0
        %v1652 = vadd.f32 %v518, %v1651
        %v1653 = vpop.f32.mrb[0].mxu0
        %v1654 = vadd.f32 %v514, %v1653
        %v1655 = vpop.f32.mrb[0].mxu0
        %v1656 = vadd.f32 %v518, %v1655
        %1657 = vmatprep.mubr.bf16.mxu0 %v478
        %1658 = vmatmul.mubr.bf16.gmra.mrb[0].mxu0 %v477
        %v1659 = vpop.f32.mrb[0].mxu0
        %v1660 = vadd.f32 %v514, %v1659
        %v1661 = vpop.f32.mrb[0].mxu0
        %v1662 = vadd.f32 %v518, %v1661
        %v1663 = vpop.f32.mrb[0].mxu0
        %v1664 = vadd.f32 %v514, %v1663
        %v1665 = vpop.f32.mrb[0].mxu0
        %v1666 = vadd.f32 %v518, %v1665
        %1667 = vmatprep.mubr.bf16.mxu0 %v481
        %1668 = vmatmul.mubr.bf16.gmra.mrb[0].mxu0 %v480
        %v1669 = vpop.f32.mrb[0].mxu0
        %v1670 = vadd.f32 %v514, %v1669
        %v1671 = vpop.f32.mrb[0].mxu0
        %v1672 = vadd.f32 %v518, %v1671
        %v1673 = vpop.f32.mrb[0].mxu0
        %v1674 = vadd.f32 %v514, %v1673
        %v1675 = vpop.f32.mrb[0].mxu0
        %v1676 = vadd.f32 %v518, %v1675
        %1677 = vmatprep.mubr.bf16.mxu0 %v484
        %1678 = vmatmul.mubr.bf16.gmra.mrb[0].mxu0 %v483
        %v1679 = vpop.f32.mrb[0].mxu0
        %v1680 = vadd.f32 %v514, %v1679
        %v1681 = vpop.f32.mrb[0].mxu0
        %v1682 = vadd.f32 %v518, %v1681
        %v1683 = vpop.f32.mrb[0].mxu0
        %v1684 = vadd.f32 %v514, %v1683
        %v1685 = vpop.f32.mrb[0].mxu0
        %v1686 = vadd.f32 %v518, %v1685
        %1687 = vmatprep.mubr.bf16.mxu0 %v487
        %1688 = vmatmul.mubr.bf16.gmra.mrb[0].mxu0 %v486
        %v1689 = vpop.f32.mrb[0].mxu0
        %v1690 = vadd.f32 %v514, %v1689
        %v1691 = vpop.f32.mrb[0].mxu0
        %v1692 = vadd.f32 %v518, %v1691
        %v1693 = vpop.f32.mrb[0].mxu0
        %v1694 = vadd.f32 %v514, %v1693
        %v1695 = vpop.f32.mrb[0].mxu0
        %v1696 = vadd.f32 %v518, %v1695
        %1697 = vmatprep.mubr.bf16.mxu0 %v490
        %1698 = vmatmul.mubr.bf16.gmra.mrb[0].mxu0 %v489
        %v1699 = vpop.f32.mrb[0].mxu0
        %v1700 = vadd.f32 %v514, %v1699
        %v1701 = vpop.f32.mrb[0].mxu0
        %v1702 = vadd.f32 %v518, %v1701
        %v1703 = vpop.f32.mrb[0].mxu0
        %v1704 = vadd.f32 %v514, %v1703
        %v1705 = vpop.f32.mrb[0].mxu0
        %v1706 = vadd.f32 %v518, %v1705
        %1707 = vmatprep.mubr.bf16.mxu0 %v493
        %1708 = vmatmul.mubr.bf16.gmra.mrb[0].mxu0 %v492
        %v1709 = vpop.f32.mrb[0].mxu0
        %v1710 = vadd.f32 %v514, %v1709
        %v1711 = vpop.f32.mrb[0].mxu0
        %v1712 = vadd.f32 %v518, %v1711
        %v1713 = vpop.f32.mrb[0].mxu0
        %v1714 = vadd.f32 %v514, %v1713
        %v1715 = vpop.f32.mrb[0].mxu0
        %v1716 = vadd.f32 %v518, %v1715
        %1717 = vmatprep.mubr.bf16.mxu0 %v496
        %1718 = vmatmul.mubr.bf16.gmra.mrb[0].mxu0 %v495
        %v1719 = vpop.f32.mrb[0].mxu0
        %v1720 = vadd.f32 %v514, %v1719
        %v1721 = vpop.f32.mrb[0].mxu0
        %v1722 = vadd.f32 %v518, %v1721
        %v1723 = vpop.f32.mrb[0].mxu0
        %v1724 = vadd.f32 %v514, %v1723
        %v1725 = vpop.f32.mrb[0].mxu0
        %v1726 = vadd.f32 %v518, %v1725
        %1727 = vmatprep.mubr.bf16.mxu0 %v499
        %1728 = vmatmul.mubr.bf16.gmra.mrb[0].mxu0 %v498
        %v1729 = vpop.f32.mrb[0].mxu0
        %v1730 = vadd.f32 %v514, %v1729
        %v1731 = vpop.f32.mrb[0].mxu0
        %v1732 = vadd.f32 %v518, %v1731
        %v1733 = vpop.f32.mrb[0].mxu0
        %v1734 = vpop.f32.mrb[0].mxu0
        %1735 = vdwg.mxu0
        %1736 = vmatprep.subr.bf16.mxu0 %v1064
        %1737 = vmatpush1.bf16.msra.mxu0 %v1063
        %1738 = vmatprep.subr.bf16.mxu0 %v1070
        %1739 = vmatpush1.bf16.msra.mxu0 %v1069
        %1740 = vmatprep.subr.bf16.mxu0 %v1076
        %1741 = vmatpush1.bf16.msra.mxu0 %v1075
        %1742 = vmatprep.subr.bf16.mxu0 %v1082
        %1743 = vmatpush1.bf16.msra.mxu0 %v1081
        %1744 = vmatprep.subr.bf16.mxu0 %v1088
        %1745 = vmatpush1.bf16.msra.mxu0 %v1087
        %1746 = vmatprep.subr.bf16.mxu0 %v1094
        %1747 = vmatpush1.bf16.msra.mxu0 %v1093
        %1748 = vmatprep.subr.bf16.mxu0 %v1100
        %1749 = vmatpush1.bf16.msra.mxu0 %v1099
        %1750 = vmatprep.subr.bf16.mxu0 %v1106
        %1751 = vmatpush1.bf16.msra.mxu0 %v1105
        %1752 = vmatprep.subr.bf16.mxu0 0
        %1753 = vmatpush1.bf16.msra.mxu0 0
        %1754 = vmatprep.subr.bf16.mxu0 0
        %1755 = vmatpush1.bf16.msra.mxu0 0
        %1756 = vmatprep.subr.bf16.mxu0 0
        %1757 = vmatpush1.bf16.msra.mxu0 0
        %1758 = vmatprep.subr.bf16.mxu0 0
        %1759 = vmatpush1.bf16.msra.mxu0 0
        %1760 = vmatprep.subr.bf16.mxu0 0
        %1761 = vmatpush1.bf16.msra.mxu0 0
        %1762 = vmatprep.subr.bf16.mxu0 0
        %1763 = vmatpush1.bf16.msra.mxu0 0
        %1764 = vmatprep.subr.bf16.mxu0 0
        %1765 = vmatpush1.bf16.msra.mxu0 0
        %1766 = vmatprep.subr.bf16.mxu0 0
        %1767 = vmatpush1.bf16.msra.mxu0 0
        %1768 = vmatprep.mubr.bf16.mxu0 0
        %1769 = vmatmul.mubr.bf16.gmra.mrb[0].mxu0 %v464
        %v1770 = vpop.f32.mrb[0].mxu0
        %v1771 = vadd.f32 %v1610, %v1770
        %v1772 = vpop.f32.mrb[0].mxu0
        %v1773 = vadd.f32 %v1612, %v1772
        %v1774 = vpop.f32.mrb[0].mxu0
        %v1775 = vadd.f32 %v1614, %v1774
        %v1776 = vpop.f32.mrb[0].mxu0
        %v1777 = vadd.f32 %v1616, %v1776
        %1778 = vmatprep.mubr.bf16.mxu0 0
        %1779 = vmatmul.mubr.bf16.gmra.mrb[0].mxu0 %v467
        %v1780 = vpop.f32.mrb[0].mxu0
        %v1781 = vadd.f32 %v1620, %v1780
        %v1782 = vpop.f32.mrb[0].mxu0
        %v1783 = vadd.f32 %v1622, %v1782
        %v1784 = vpop.f32.mrb[0].mxu0
        %v1785 = vadd.f32 %v1624, %v1784
        %v1786 = vpop.f32.mrb[0].mxu0
        %v1787 = vadd.f32 %v1626, %v1786
        %1788 = vmatprep.mubr.bf16.mxu0 0
        %1789 = vmatmul.mubr.bf16.gmra.mrb[0].mxu0 %v470
        %v1790 = vpop.f32.mrb[0].mxu0
        %v1791 = vadd.f32 %v1630, %v1790
        %v1792 = vpop.f32.mrb[0].mxu0
        %v1793 = vadd.f32 %v1632, %v1792
        %v1794 = vpop.f32.mrb[0].mxu0
        %v1795 = vadd.f32 %v1634, %v1794
        %v1796 = vpop.f32.mrb[0].mxu0
        %v1797 = vadd.f32 %v1636, %v1796
        %1798 = vmatprep.mubr.bf16.mxu0 0
        %1799 = vmatmul.mubr.bf16.gmra.mrb[0].mxu0 %v473
        %v1800 = vpop.f32.mrb[0].mxu0
        %v1801 = vadd.f32 %v1640, %v1800
        %v1802 = vpop.f32.mrb[0].mxu0
        %v1803 = vadd.f32 %v1642, %v1802
        %v1804 = vpop.f32.mrb[0].mxu0
        %v1805 = vadd.f32 %v1644, %v1804
        %v1806 = vpop.f32.mrb[0].mxu0
        %v1807 = vadd.f32 %v1646, %v1806
        %1808 = vmatprep.mubr.bf16.mxu0 0
        %1809 = vmatmul.mubr.bf16.gmra.mrb[0].mxu0 %v476
        %v1810 = vpop.f32.mrb[0].mxu0
        %v1811 = vadd.f32 %v1650, %v1810
        %v1812 = vpop.f32.mrb[0].mxu0
        %v1813 = vadd.f32 %v1652, %v1812
        %v1814 = vpop.f32.mrb[0].mxu0
        %v1815 = vadd.f32 %v1654, %v1814
        %v1816 = vpop.f32.mrb[0].mxu0
        %v1817 = vadd.f32 %v1656, %v1816
        %1818 = vmatprep.mubr.bf16.mxu0 0
        %1819 = vmatmul.mubr.bf16.gmra.mrb[0].mxu0 %v479
        %v1820 = vpop.f32.mrb[0].mxu0
        %v1821 = vadd.f32 %v1660, %v1820
        %v1822 = vpop.f32.mrb[0].mxu0
        %v1823 = vadd.f32 %v1662, %v1822
        %v1824 = vpop.f32.mrb[0].mxu0
        %v1825 = vadd.f32 %v1664, %v1824
        %v1826 = vpop.f32.mrb[0].mxu0
        %v1827 = vadd.f32 %v1666, %v1826
        %1828 = vmatprep.mubr.bf16.mxu0 0
        %1829 = vmatmul.mubr.bf16.gmra.mrb[0].mxu0 %v482
        %v1830 = vpop.f32.mrb[0].mxu0
        %v1831 = vadd.f32 %v1670, %v1830
        %v1832 = vpop.f32.mrb[0].mxu0
        %v1833 = vadd.f32 %v1672, %v1832
        %v1834 = vpop.f32.mrb[0].mxu0
        %v1835 = vadd.f32 %v1674, %v1834
        %v1836 = vpop.f32.mrb[0].mxu0
        %v1837 = vadd.f32 %v1676, %v1836
        %1838 = vmatprep.mubr.bf16.mxu0 0
        %1839 = vmatmul.mubr.bf16.gmra.mrb[0].mxu0 %v485
        %v1840 = vpop.f32.mrb[0].mxu0
        %v1841 = vadd.f32 %v1680, %v1840
        %v1842 = vpop.f32.mrb[0].mxu0
        %v1843 = vadd.f32 %v1682, %v1842
        %v1844 = vpop.f32.mrb[0].mxu0
        %v1845 = vadd.f32 %v1684, %v1844
        %v1846 = vpop.f32.mrb[0].mxu0
        %v1847 = vadd.f32 %v1686, %v1846
        %1848 = vmatprep.mubr.bf16.mxu0 0
        %1849 = vmatmul.mubr.bf16.gmra.mrb[0].mxu0 %v488
        %v1850 = vpop.f32.mrb[0].mxu0
        %v1851 = vadd.f32 %v1690, %v1850
        %v1852 = vpop.f32.mrb[0].mxu0
        %v1853 = vadd.f32 %v1692, %v1852
        %v1854 = vpop.f32.mrb[0].mxu0
        %v1855 = vadd.f32 %v1694, %v1854
        %v1856 = vpop.f32.mrb[0].mxu0
        %v1857 = vadd.f32 %v1696, %v1856
        %1858 = vmatprep.mubr.bf16.mxu0 0
        %1859 = vmatmul.mubr.bf16.gmra.mrb[0].mxu0 %v491
        %v1860 = vpop.f32.mrb[0].mxu0
        %v1861 = vadd.f32 %v1700, %v1860
        %v1862 = vpop.f32.mrb[0].mxu0
        %v1863 = vadd.f32 %v1702, %v1862
        %v1864 = vpop.f32.mrb[0].mxu0
        %v1865 = vadd.f32 %v1704, %v1864
        %v1866 = vpop.f32.mrb[0].mxu0
        %v1867 = vadd.f32 %v1706, %v1866
        %1868 = vmatprep.mubr.bf16.mxu0 0
        %1869 = vmatmul.mubr.bf16.gmra.mrb[0].mxu0 %v494
        %v1870 = vpop.f32.mrb[0].mxu0
        %v1871 = vadd.f32 %v1710, %v1870
        %v1872 = vpop.f32.mrb[0].mxu0
        %v1873 = vadd.f32 %v1712, %v1872
        %v1874 = vpop.f32.mrb[0].mxu0
        %v1875 = vadd.f32 %v1714, %v1874
        %v1876 = vpop.f32.mrb[0].mxu0
        %v1877 = vadd.f32 %v1716, %v1876
        %1878 = vmatprep.mubr.bf16.mxu0 0
        %1879 = vmatmul.mubr.bf16.gmra.mrb[0].mxu0 %v497
        %v1880 = vpop.f32.mrb[0].mxu0
        %v1881 = vadd.f32 %v1720, %v1880
        %v1882 = vpop.f32.mrb[0].mxu0
        %v1883 = vadd.f32 %v1722, %v1882
        %v1884 = vpop.f32.mrb[0].mxu0
        %v1885 = vadd.f32 %v1724, %v1884
        %v1886 = vpop.f32.mrb[0].mxu0
        %v1887 = vadd.f32 %v1726, %v1886
        %1888 = vmatprep.mubr.bf16.mxu0 0
        %1889 = vmatmul.mubr.bf16.gmra.mrb[0].mxu0 %v500
        %v1890 = vpop.f32.mrb[0].mxu0
        %v1891 = vadd.f32 %v1730, %v1890
        %v1892 = vpop.f32.mrb[0].mxu0
        %v1893 = vadd.f32 %v1732, %v1892
        %v1894 = vpop.f32.mrb[0].mxu0
        %v1895 = vpop.f32.mrb[0].mxu0
        %1896 = vdwg.mxu0
        %1897 = vmatprep.subr.bf16.mxu0 %v970
        %1898 = vmatpush1.bf16.msra.mxu0 %v969
        %1899 = vmatprep.subr.bf16.mxu0 %v976
        %1900 = vmatpush1.bf16.msra.mxu0 %v975
        %1901 = vmatprep.subr.bf16.mxu0 %v982
        %1902 = vmatpush1.bf16.msra.mxu0 %v981
        %1903 = vmatprep.subr.bf16.mxu0 %v988
        %1904 = vmatpush1.bf16.msra.mxu0 %v987
        %1905 = vmatprep.subr.bf16.mxu0 %v994
        %1906 = vmatpush1.bf16.msra.mxu0 %v993
        %1907 = vmatprep.subr.bf16.mxu0 %v1000
        %1908 = vmatpush1.bf16.msra.mxu0 %v999
        %1909 = vmatprep.subr.bf16.mxu0 %v1006
        %1910 = vmatpush1.bf16.msra.mxu0 %v1005
        %1911 = vmatprep.subr.bf16.mxu0 %v1012
        %1912 = vmatpush1.bf16.msra.mxu0 %v1011
        %1913 = vmatprep.subr.bf16.mxu0 %v1018
        %1914 = vmatpush1.bf16.msra.mxu0 %v1017
        %1915 = vmatprep.subr.bf16.mxu0 %v1024
        %1916 = vmatpush1.bf16.msra.mxu0 %v1023
        %1917 = vmatprep.subr.bf16.mxu0 %v1030
        %1918 = vmatpush1.bf16.msra.mxu0 %v1029
        %1919 = vmatprep.subr.bf16.mxu0 %v1036
        %1920 = vmatpush1.bf16.msra.mxu0 %v1035
        %1921 = vmatprep.subr.bf16.mxu0 %v1042
        %1922 = vmatpush1.bf16.msra.mxu0 %v1041
        %1923 = vmatprep.subr.bf16.mxu0 %v1048
        %1924 = vmatpush1.bf16.msra.mxu0 %v1047
        %1925 = vmatprep.subr.bf16.mxu0 %v1054
        %1926 = vmatpush1.bf16.msra.mxu0 %v1053
        %1927 = vmatprep.subr.bf16.mxu0 %v1060
        %1928 = vmatpush1.bf16.msra.mxu0 %v1059
        %1929 = vmatprep.mubr.bf16.mxu0 %v463
        %1930 = vmatmul.mubr.bf16.gmra.mrb[0].mxu0 %v462
        %v1931 = vpop.f32.mrb[0].mxu0
        %v1932 = vadd.f32 %v522, %v1931
        %v1933 = vpop.f32.mrb[0].mxu0
        %v1934 = vadd.f32 %v526, %v1933
        %v1935 = vpop.f32.mrb[0].mxu0
        %v1936 = vadd.f32 %v522, %v1935
        %v1937 = vpop.f32.mrb[0].mxu0
        %v1938 = vadd.f32 %v526, %v1937
        %1939 = vmatprep.mubr.bf16.mxu0 %v466
        %1940 = vmatmul.mubr.bf16.gmra.mrb[0].mxu0 %v465
        %v1941 = vpop.f32.mrb[0].mxu0
        %v1942 = vadd.f32 %v522, %v1941
        %v1943 = vpop.f32.mrb[0].mxu0
        %v1944 = vadd.f32 %v526, %v1943
        %v1945 = vpop.f32.mrb[0].mxu0
        %v1946 = vadd.f32 %v522, %v1945
        %v1947 = vpop.f32.mrb[0].mxu0
        %v1948 = vadd.f32 %v526, %v1947
        %1949 = vmatprep.mubr.bf16.mxu0 %v469
        %1950 = vmatmul.mubr.bf16.gmra.mrb[0].mxu0 %v468
        %v1951 = vpop.f32.mrb[0].mxu0
        %v1952 = vadd.f32 %v522, %v1951
        %v1953 = vpop.f32.mrb[0].mxu0
        %v1954 = vadd.f32 %v526, %v1953
        %v1955 = vpop.f32.mrb[0].mxu0
        %v1956 = vadd.f32 %v522, %v1955
        %v1957 = vpop.f32.mrb[0].mxu0
        %v1958 = vadd.f32 %v526, %v1957
        %1959 = vmatprep.mubr.bf16.mxu0 %v472
        %1960 = vmatmul.mubr.bf16.gmra.mrb[0].mxu0 %v471
        %v1961 = vpop.f32.mrb[0].mxu0
        %v1962 = vadd.f32 %v522, %v1961
        %v1963 = vpop.f32.mrb[0].mxu0
        %v1964 = vadd.f32 %v526, %v1963
        %v1965 = vpop.f32.mrb[0].mxu0
        %v1966 = vadd.f32 %v522, %v1965
        %v1967 = vpop.f32.mrb[0].mxu0
        %v1968 = vadd.f32 %v526, %v1967
        %1969 = vmatprep.mubr.bf16.mxu0 %v475
        %1970 = vmatmul.mubr.bf16.gmra.mrb[0].mxu0 %v474
        %v1971 = vpop.f32.mrb[0].mxu0
        %v1972 = vadd.f32 %v522, %v1971
        %v1973 = vpop.f32.mrb[0].mxu0
        %v1974 = vadd.f32 %v526, %v1973
        %v1975 = vpop.f32.mrb[0].mxu0
        %v1976 = vadd.f32 %v522, %v1975
        %v1977 = vpop.f32.mrb[0].mxu0
        %v1978 = vadd.f32 %v526, %v1977
        %1979 = vmatprep.mubr.bf16.mxu0 %v478
        %1980 = vmatmul.mubr.bf16.gmra.mrb[0].mxu0 %v477
        %v1981 = vpop.f32.mrb[0].mxu0
        %v1982 = vadd.f32 %v522, %v1981
        %v1983 = vpop.f32.mrb[0].mxu0
        %v1984 = vadd.f32 %v526, %v1983
        %v1985 = vpop.f32.mrb[0].mxu0
        %v1986 = vadd.f32 %v522, %v1985
        %v1987 = vpop.f32.mrb[0].mxu0
        %v1988 = vadd.f32 %v526, %v1987
        %1989 = vmatprep.mubr.bf16.mxu0 %v481
        %1990 = vmatmul.mubr.bf16.gmra.mrb[0].mxu0 %v480
        %v1991 = vpop.f32.mrb[0].mxu0
        %v1992 = vadd.f32 %v522, %v1991
        %v1993 = vpop.f32.mrb[0].mxu0
        %v1994 = vadd.f32 %v526, %v1993
        %v1995 = vpop.f32.mrb[0].mxu0
        %v1996 = vadd.f32 %v522, %v1995
        %v1997 = vpop.f32.mrb[0].mxu0
        %v1998 = vadd.f32 %v526, %v1997
        %1999 = vmatprep.mubr.bf16.mxu0 %v484
        %2000 = vmatmul.mubr.bf16.gmra.mrb[0].mxu0 %v483
        %v2001 = vpop.f32.mrb[0].mxu0
        %v2002 = vadd.f32 %v522, %v2001
        %v2003 = vpop.f32.mrb[0].mxu0
        %v2004 = vadd.f32 %v526, %v2003
        %v2005 = vpop.f32.mrb[0].mxu0
        %v2006 = vadd.f32 %v522, %v2005
        %v2007 = vpop.f32.mrb[0].mxu0
        %v2008 = vadd.f32 %v526, %v2007
        %2009 = vmatprep.mubr.bf16.mxu0 %v487
        %2010 = vmatmul.mubr.bf16.gmra.mrb[0].mxu0 %v486
        %v2011 = vpop.f32.mrb[0].mxu0
        %v2012 = vadd.f32 %v522, %v2011
        %v2013 = vpop.f32.mrb[0].mxu0
        %v2014 = vadd.f32 %v526, %v2013
        %v2015 = vpop.f32.mrb[0].mxu0
        %v2016 = vadd.f32 %v522, %v2015
        %v2017 = vpop.f32.mrb[0].mxu0
        %v2018 = vadd.f32 %v526, %v2017
        %2019 = vmatprep.mubr.bf16.mxu0 %v490
        %2020 = vmatmul.mubr.bf16.gmra.mrb[0].mxu0 %v489
        %v2021 = vpop.f32.mrb[0].mxu0
        %v2022 = vadd.f32 %v522, %v2021
        %v2023 = vpop.f32.mrb[0].mxu0
        %v2024 = vadd.f32 %v526, %v2023
        %v2025 = vpop.f32.mrb[0].mxu0
        %v2026 = vadd.f32 %v522, %v2025
        %v2027 = vpop.f32.mrb[0].mxu0
        %v2028 = vadd.f32 %v526, %v2027
        %2029 = vmatprep.mubr.bf16.mxu0 %v493
        %2030 = vmatmul.mubr.bf16.gmra.mrb[0].mxu0 %v492
        %v2031 = vpop.f32.mrb[0].mxu0
        %v2032 = vadd.f32 %v522, %v2031
        %v2033 = vpop.f32.mrb[0].mxu0
        %v2034 = vadd.f32 %v526, %v2033
        %v2035 = vpop.f32.mrb[0].mxu0
        %v2036 = vadd.f32 %v522, %v2035
        %v2037 = vpop.f32.mrb[0].mxu0
        %v2038 = vadd.f32 %v526, %v2037
        %2039 = vmatprep.mubr.bf16.mxu0 %v496
        %2040 = vmatmul.mubr.bf16.gmra.mrb[0].mxu0 %v495
        %v2041 = vpop.f32.mrb[0].mxu0
        %v2042 = vadd.f32 %v522, %v2041
        %v2043 = vpop.f32.mrb[0].mxu0
        %v2044 = vadd.f32 %v526, %v2043
        %v2045 = vpop.f32.mrb[0].mxu0
        %v2046 = vadd.f32 %v522, %v2045
        %v2047 = vpop.f32.mrb[0].mxu0
        %v2048 = vadd.f32 %v526, %v2047
        %2049 = vmatprep.mubr.bf16.mxu0 %v499
        %2050 = vmatmul.mubr.bf16.gmra.mrb[0].mxu0 %v498
        %v2051 = vpop.f32.mrb[0].mxu0
        %v2052 = vadd.f32 %v522, %v2051
        %v2053 = vpop.f32.mrb[0].mxu0
        %v2054 = vadd.f32 %v526, %v2053
        %v2055 = vpop.f32.mrb[0].mxu0
        %v2056 = vpop.f32.mrb[0].mxu0
        %2057 = vdwg.mxu0
        %2058 = vmatprep.subr.bf16.mxu0 %v1066
        %2059 = vmatpush1.bf16.msra.mxu0 %v1065
        %2060 = vmatprep.subr.bf16.mxu0 %v1072
        %2061 = vmatpush1.bf16.msra.mxu0 %v1071
        %2062 = vmatprep.subr.bf16.mxu0 %v1078
        %2063 = vmatpush1.bf16.msra.mxu0 %v1077
        %2064 = vmatprep.subr.bf16.mxu0 %v1084
        %2065 = vmatpush1.bf16.msra.mxu0 %v1083
        %2066 = vmatprep.subr.bf16.mxu0 %v1090
        %2067 = vmatpush1.bf16.msra.mxu0 %v1089
        %2068 = vmatprep.subr.bf16.mxu0 %v1096
        %2069 = vmatpush1.bf16.msra.mxu0 %v1095
        %2070 = vmatprep.subr.bf16.mxu0 %v1102
        %2071 = vmatpush1.bf16.msra.mxu0 %v1101
        %2072 = vmatprep.subr.bf16.mxu0 %v1108
        %2073 = vmatpush1.bf16.msra.mxu0 %v1107
        %2074 = vmatprep.subr.bf16.mxu0 0
        %2075 = vmatpush1.bf16.msra.mxu0 0
        %2076 = vmatprep.subr.bf16.mxu0 0
        %2077 = vmatpush1.bf16.msra.mxu0 0
        %2078 = vmatprep.subr.bf16.mxu0 0
        %2079 = vmatpush1.bf16.msra.mxu0 0
        %2080 = vmatprep.subr.bf16.mxu0 0
        %2081 = vmatpush1.bf16.msra.mxu0 0
        %2082 = vmatprep.subr.bf16.mxu0 0
        %2083 = vmatpush1.bf16.msra.mxu0 0
        %2084 = vmatprep.subr.bf16.mxu0 0
        %2085 = vmatpush1.bf16.msra.mxu0 0
        %2086 = vmatprep.subr.bf16.mxu0 0
        %2087 = vmatpush1.bf16.msra.mxu0 0
        %2088 = vmatprep.subr.bf16.mxu0 0
        %2089 = vmatpush1.bf16.msra.mxu0 0
        %2090 = vmatprep.mubr.bf16.mxu0 0
        %2091 = vmatmul.mubr.bf16.gmra.mrb[0].mxu0 %v464
        %v2092 = vpop.f32.mrb[0].mxu0
        %v2093 = vadd.f32 %v1932, %v2092
        %v2094 = vpop.f32.mrb[0].mxu0
        %v2095 = vadd.f32 %v1934, %v2094
        %v2096 = vpop.f32.mrb[0].mxu0
        %v2097 = vadd.f32 %v1936, %v2096
        %v2098 = vpop.f32.mrb[0].mxu0
        %v2099 = vadd.f32 %v1938, %v2098
        %2100 = vmatprep.mubr.bf16.mxu0 0
        %2101 = vmatmul.mubr.bf16.gmra.mrb[0].mxu0 %v467
        %v2102 = vpop.f32.mrb[0].mxu0
        %v2103 = vadd.f32 %v1942, %v2102
        %v2104 = vpop.f32.mrb[0].mxu0
        %v2105 = vadd.f32 %v1944, %v2104
        %v2106 = vpop.f32.mrb[0].mxu0
        %v2107 = vadd.f32 %v1946, %v2106
        %v2108 = vpop.f32.mrb[0].mxu0
        %v2109 = vadd.f32 %v1948, %v2108
        %2110 = vmatprep.mubr.bf16.mxu0 0
        %2111 = vmatmul.mubr.bf16.gmra.mrb[0].mxu0 %v470
        %v2112 = vpop.f32.mrb[0].mxu0
        %v2113 = vadd.f32 %v1952, %v2112
        %v2114 = vpop.f32.mrb[0].mxu0
        %v2115 = vadd.f32 %v1954, %v2114
        %v2116 = vpop.f32.mrb[0].mxu0
        %v2117 = vadd.f32 %v1956, %v2116
        %v2118 = vpop.f32.mrb[0].mxu0
        %v2119 = vadd.f32 %v1958, %v2118
        %2120 = vmatprep.mubr.bf16.mxu0 0
        %2121 = vmatmul.mubr.bf16.gmra.mrb[0].mxu0 %v473
        %v2122 = vpop.f32.mrb[0].mxu0
        %v2123 = vadd.f32 %v1962, %v2122
        %v2124 = vpop.f32.mrb[0].mxu0
        %v2125 = vadd.f32 %v1964, %v2124
        %v2126 = vpop.f32.mrb[0].mxu0
        %v2127 = vadd.f32 %v1966, %v2126
        %v2128 = vpop.f32.mrb[0].mxu0
        %v2129 = vadd.f32 %v1968, %v2128
        %2130 = vmatprep.mubr.bf16.mxu0 0
        %2131 = vmatmul.mubr.bf16.gmra.mrb[0].mxu0 %v476
        %v2132 = vpop.f32.mrb[0].mxu0
        %v2133 = vadd.f32 %v1972, %v2132
        %v2134 = vpop.f32.mrb[0].mxu0
        %v2135 = vadd.f32 %v1974, %v2134
        %v2136 = vpop.f32.mrb[0].mxu0
        %v2137 = vadd.f32 %v1976, %v2136
        %v2138 = vpop.f32.mrb[0].mxu0
        %v2139 = vadd.f32 %v1978, %v2138
        %2140 = vmatprep.mubr.bf16.mxu0 0
        %2141 = vmatmul.mubr.bf16.gmra.mrb[0].mxu0 %v479
        %v2142 = vpop.f32.mrb[0].mxu0
        %v2143 = vadd.f32 %v1982, %v2142
        %v2144 = vpop.f32.mrb[0].mxu0
        %v2145 = vadd.f32 %v1984, %v2144
        %v2146 = vpop.f32.mrb[0].mxu0
        %v2147 = vadd.f32 %v1986, %v2146
        %v2148 = vpop.f32.mrb[0].mxu0
        %v2149 = vadd.f32 %v1988, %v2148
        %2150 = vmatprep.mubr.bf16.mxu0 0
        %2151 = vmatmul.mubr.bf16.gmra.mrb[0].mxu0 %v482
        %v2152 = vpop.f32.mrb[0].mxu0
        %v2153 = vadd.f32 %v1992, %v2152
        %v2154 = vpop.f32.mrb[0].mxu0
        %v2155 = vadd.f32 %v1994, %v2154
        %v2156 = vpop.f32.mrb[0].mxu0
        %v2157 = vadd.f32 %v1996, %v2156
        %v2158 = vpop.f32.mrb[0].mxu0
        %v2159 = vadd.f32 %v1998, %v2158
        %2160 = vmatprep.mubr.bf16.mxu0 0
        %2161 = vmatmul.mubr.bf16.gmra.mrb[0].mxu0 %v485
        %v2162 = vpop.f32.mrb[0].mxu0
        %v2163 = vadd.f32 %v2002, %v2162
        %v2164 = vpop.f32.mrb[0].mxu0
        %v2165 = vadd.f32 %v2004, %v2164
        %v2166 = vpop.f32.mrb[0].mxu0
        %v2167 = vadd.f32 %v2006, %v2166
        %v2168 = vpop.f32.mrb[0].mxu0
        %v2169 = vadd.f32 %v2008, %v2168
        %2170 = vmatprep.mubr.bf16.mxu0 0
        %2171 = vmatmul.mubr.bf16.gmra.mrb[0].mxu0 %v488
        %v2172 = vpop.f32.mrb[0].mxu0
        %v2173 = vadd.f32 %v2012, %v2172
        %v2174 = vpop.f32.mrb[0].mxu0
        %v2175 = vadd.f32 %v2014, %v2174
        %v2176 = vpop.f32.mrb[0].mxu0
        %v2177 = vadd.f32 %v2016, %v2176
        %v2178 = vpop.f32.mrb[0].mxu0
        %v2179 = vadd.f32 %v2018, %v2178
        %2180 = vmatprep.mubr.bf16.mxu0 0
        %2181 = vmatmul.mubr.bf16.gmra.mrb[0].mxu0 %v491
        %v2182 = vpop.f32.mrb[0].mxu0
        %v2183 = vadd.f32 %v2022, %v2182
        %v2184 = vpop.f32.mrb[0].mxu0
        %v2185 = vadd.f32 %v2024, %v2184
        %v2186 = vpop.f32.mrb[0].mxu0
        %v2187 = vadd.f32 %v2026, %v2186
        %v2188 = vpop.f32.mrb[0].mxu0
        %v2189 = vadd.f32 %v2028, %v2188
        %2190 = vmatprep.mubr.bf16.mxu0 0
        %2191 = vmatmul.mubr.bf16.gmra.mrb[0].mxu0 %v494
        %v2192 = vpop.f32.mrb[0].mxu0
        %v2193 = vadd.f32 %v2032, %v2192
        %v2194 = vpop.f32.mrb[0].mxu0
        %v2195 = vadd.f32 %v2034, %v2194
        %v2196 = vpop.f32.mrb[0].mxu0
        %v2197 = vadd.f32 %v2036, %v2196
        %v2198 = vpop.f32.mrb[0].mxu0
        %v2199 = vadd.f32 %v2038, %v2198
        %2200 = vmatprep.mubr.bf16.mxu0 0
        %2201 = vmatmul.mubr.bf16.gmra.mrb[0].mxu0 %v497
        %v2202 = vpop.f32.mrb[0].mxu0
        %v2203 = vadd.f32 %v2042, %v2202
        %v2204 = vpop.f32.mrb[0].mxu0
        %v2205 = vadd.f32 %v2044, %v2204
        %v2206 = vpop.f32.mrb[0].mxu0
        %v2207 = vadd.f32 %v2046, %v2206
        %v2208 = vpop.f32.mrb[0].mxu0
        %v2209 = vadd.f32 %v2048, %v2208
        %2210 = vmatprep.mubr.bf16.mxu0 0
        %2211 = vmatmul.mubr.bf16.gmra.mrb[0].mxu0 %v500
        %v2212 = vpop.f32.mrb[0].mxu0
        %v2213 = vadd.f32 %v2052, %v2212
        %v2214 = vpop.f32.mrb[0].mxu0
        %v2215 = vadd.f32 %v2054, %v2214
        %v2216 = vpop.f32.mrb[0].mxu0
        %v2217 = vpop.f32.mrb[0].mxu0
        %2218 = vdwg.mxu0
        %2219 = vst [vmem:[%s238] sm:$0xff] %v1449
        %2220 = vst [vmem:[%s238 + $0x8] sm:$0xff] %v1451
        %2221 = vst [vmem:[%s238 + $0x10] sm:$0xff] %v1771
        %2222 = vst [vmem:[%s238 + $0x18] sm:$0xff] %v1773
        %2223 = vst [vmem:[%s238 + $0x20] sm:$0xff] %v2093
        %2224 = vst [vmem:[%s238 + $0x28] sm:$0xff] %v2095
        %2225 = vst [vmem:[%s238 + $0x30] sm:$0xff] %v1453
        %2226 = vst [vmem:[%s238 + $0x38] sm:$0xff] %v1455
        %2227 = vst [vmem:[%s238 + $0x40] sm:$0xff] %v1775
        %2228 = vst [vmem:[%s238 + $0x48] sm:$0xff] %v1777
        %2229 = vst [vmem:[%s238 + $0x50] sm:$0xff] %v2097
        %2230 = vst [vmem:[%s238 + $0x58] sm:$0xff] %v2099
        %2231 = vst [vmem:[%s238 + $0x60] sm:$0xff] %v1459
        %2232 = vst [vmem:[%s238 + $0x68] sm:$0xff] %v1461
        %2233 = vst [vmem:[%s238 + $0x70] sm:$0xff] %v1781
        %2234 = vst [vmem:[%s238 + $0x78] sm:$0xff] %v1783
        %2235 = vst [vmem:[%s238 + $0x80] sm:$0xff] %v2103
        %2236 = vst [vmem:[%s238 + $0x88] sm:$0xff] %v2105
        %2237 = vst [vmem:[%s238 + $0x90] sm:$0xff] %v1463
        %2238 = vst [vmem:[%s238 + $0x98] sm:$0xff] %v1465
        %2239 = vst [vmem:[%s238 + $0xa0] sm:$0xff] %v1785
        %2240 = vst [vmem:[%s238 + $0xa8] sm:$0xff] %v1787
        %2241 = vst [vmem:[%s238 + $0xb0] sm:$0xff] %v2107
        %2242 = vst [vmem:[%s238 + $0xb8] sm:$0xff] %v2109
        %2243 = vst [vmem:[%s238 + $0xc0] sm:$0xff] %v1469
        %2244 = vst [vmem:[%s238 + $0xc8] sm:$0xff] %v1471
        %2245 = vst [vmem:[%s238 + $0xd0] sm:$0xff] %v1791
        %2246 = vst [vmem:[%s238 + $0xd8] sm:$0xff] %v1793
        %2247 = vst [vmem:[%s238 + $0xe0] sm:$0xff] %v2113
        %2248 = vst [vmem:[%s238 + $0xe8] sm:$0xff] %v2115
        %2249 = vst [vmem:[%s238 + $0xf0] sm:$0xff] %v1473
        %2250 = vst [vmem:[%s238 + $0xf8] sm:$0xff] %v1475
        %2251 = vst [vmem:[%s238 + $0x100] sm:$0xff] %v1795
        %2252 = vst [vmem:[%s238 + $0x108] sm:$0xff] %v1797
        %2253 = vst [vmem:[%s238 + $0x110] sm:$0xff] %v2117
        %2254 = vst [vmem:[%s238 + $0x118] sm:$0xff] %v2119
        %2255 = vst [vmem:[%s238 + $0x120] sm:$0xff] %v1479
        %2256 = vst [vmem:[%s238 + $0x128] sm:$0xff] %v1481
        %2257 = vst [vmem:[%s238 + $0x130] sm:$0xff] %v1801
        %2258 = vst [vmem:[%s238 + $0x138] sm:$0xff] %v1803
        %2259 = vst [vmem:[%s238 + $0x140] sm:$0xff] %v2123
        %2260 = vst [vmem:[%s238 + $0x148] sm:$0xff] %v2125
        %2261 = vst [vmem:[%s238 + $0x150] sm:$0xff] %v1483
        %2262 = vst [vmem:[%s238 + $0x158] sm:$0xff] %v1485
        %2263 = vst [vmem:[%s238 + $0x160] sm:$0xff] %v1805
        %2264 = vst [vmem:[%s238 + $0x168] sm:$0xff] %v1807
        %2265 = vst [vmem:[%s238 + $0x170] sm:$0xff] %v2127
        %2266 = vst [vmem:[%s238 + $0x178] sm:$0xff] %v2129
        %2267 = vst [vmem:[%s238 + $0x180] sm:$0xff] %v1489
        %2268 = vst [vmem:[%s238 + $0x188] sm:$0xff] %v1491
        %2269 = vst [vmem:[%s238 + $0x190] sm:$0xff] %v1811
        %2270 = vst [vmem:[%s238 + $0x198] sm:$0xff] %v1813
        %2271 = vst [vmem:[%s238 + $0x1a0] sm:$0xff] %v2133
        %2272 = vst [vmem:[%s238 + $0x1a8] sm:$0xff] %v2135
        %2273 = vst [vmem:[%s238 + $0x1b0] sm:$0xff] %v1493
        %2274 = vst [vmem:[%s238 + $0x1b8] sm:$0xff] %v1495
        %2275 = vst [vmem:[%s238 + $0x1c0] sm:$0xff] %v1815
        %2276 = vst [vmem:[%s238 + $0x1c8] sm:$0xff] %v1817
        %2277 = vst [vmem:[%s238 + $0x1d0] sm:$0xff] %v2137
        %2278 = vst [vmem:[%s238 + $0x1d8] sm:$0xff] %v2139
        %2279 = vst [vmem:[%s238 + $0x1e0] sm:$0xff] %v1499
        %2280 = vst [vmem:[%s238 + $0x1e8] sm:$0xff] %v1501
        %2281 = vst [vmem:[%s238 + $0x1f0] sm:$0xff] %v1821
        %2282 = vst [vmem:[%s238 + $0x1f8] sm:$0xff] %v1823
        %2283 = vst [vmem:[%s238 + $0x200] sm:$0xff] %v2143
        %2284 = vst [vmem:[%s238 + $0x208] sm:$0xff] %v2145
        %2285 = vst [vmem:[%s238 + $0x210] sm:$0xff] %v1503
        %2286 = vst [vmem:[%s238 + $0x218] sm:$0xff] %v1505
        %2287 = vst [vmem:[%s238 + $0x220] sm:$0xff] %v1825
        %2288 = vst [vmem:[%s238 + $0x228] sm:$0xff] %v1827
        %2289 = vst [vmem:[%s238 + $0x230] sm:$0xff] %v2147
        %2290 = vst [vmem:[%s238 + $0x238] sm:$0xff] %v2149
        %2291 = vst [vmem:[%s238 + $0x240] sm:$0xff] %v1509
        %2292 = vst [vmem:[%s238 + $0x248] sm:$0xff] %v1511
        %2293 = vst [vmem:[%s238 + $0x250] sm:$0xff] %v1831
        %2294 = vst [vmem:[%s238 + $0x258] sm:$0xff] %v1833
        %2295 = vst [vmem:[%s238 + $0x260] sm:$0xff] %v2153
        %2296 = vst [vmem:[%s238 + $0x268] sm:$0xff] %v2155
        %2297 = vst [vmem:[%s238 + $0x270] sm:$0xff] %v1513
        %2298 = vst [vmem:[%s238 + $0x278] sm:$0xff] %v1515
        %2299 = vst [vmem:[%s238 + $0x280] sm:$0xff] %v1835
        %2300 = vst [vmem:[%s238 + $0x288] sm:$0xff] %v1837
        %2301 = vst [vmem:[%s238 + $0x290] sm:$0xff] %v2157
        %2302 = vst [vmem:[%s238 + $0x298] sm:$0xff] %v2159
        %2303 = vst [vmem:[%s238 + $0x2a0] sm:$0xff] %v1519
        %2304 = vst [vmem:[%s238 + $0x2a8] sm:$0xff] %v1521
        %2305 = vst [vmem:[%s238 + $0x2b0] sm:$0xff] %v1841
        %2306 = vst [vmem:[%s238 + $0x2b8] sm:$0xff] %v1843
        %2307 = vst [vmem:[%s238 + $0x2c0] sm:$0xff] %v2163
        %2308 = vst [vmem:[%s238 + $0x2c8] sm:$0xff] %v2165
        %2309 = vst [vmem:[%s238 + $0x2d0] sm:$0xff] %v1523
        %2310 = vst [vmem:[%s238 + $0x2d8] sm:$0xff] %v1525
        %2311 = vst [vmem:[%s238 + $0x2e0] sm:$0xff] %v1845
        %2312 = vst [vmem:[%s238 + $0x2e8] sm:$0xff] %v1847
        %2313 = vst [vmem:[%s238 + $0x2f0] sm:$0xff] %v2167
        %2314 = vst [vmem:[%s238 + $0x2f8] sm:$0xff] %v2169
        %2315 = vst [vmem:[%s238 + $0x300] sm:$0xff] %v1529
        %2316 = vst [vmem:[%s238 + $0x308] sm:$0xff] %v1531
        %2317 = vst [vmem:[%s238 + $0x310] sm:$0xff] %v1851
        %2318 = vst [vmem:[%s238 + $0x318] sm:$0xff] %v1853
        %2319 = vst [vmem:[%s238 + $0x320] sm:$0xff] %v2173
        %2320 = vst [vmem:[%s238 + $0x328] sm:$0xff] %v2175
        %2321 = vst [vmem:[%s238 + $0x330] sm:$0xff] %v1533
        %2322 = vst [vmem:[%s238 + $0x338] sm:$0xff] %v1535
        %2323 = vst [vmem:[%s238 + $0x340] sm:$0xff] %v1855
        %2324 = vst [vmem:[%s238 + $0x348] sm:$0xff] %v1857
        %2325 = vst [vmem:[%s238 + $0x350] sm:$0xff] %v2177
        %2326 = vst [vmem:[%s238 + $0x358] sm:$0xff] %v2179
        %2327 = vst [vmem:[%s238 + $0x360] sm:$0xff] %v1539
        %2328 = vst [vmem:[%s238 + $0x368] sm:$0xff] %v1541
        %2329 = vst [vmem:[%s238 + $0x370] sm:$0xff] %v1861
        %2330 = vst [vmem:[%s238 + $0x378] sm:$0xff] %v1863
        %2331 = vst [vmem:[%s238 + $0x380] sm:$0xff] %v2183
        %2332 = vst [vmem:[%s238 + $0x388] sm:$0xff] %v2185
        %2333 = vst [vmem:[%s238 + $0x390] sm:$0xff] %v1543
        %2334 = vst [vmem:[%s238 + $0x398] sm:$0xff] %v1545
        %2335 = vst [vmem:[%s238 + $0x3a0] sm:$0xff] %v1865
        %2336 = vst [vmem:[%s238 + $0x3a8] sm:$0xff] %v1867
        %2337 = vst [vmem:[%s238 + $0x3b0] sm:$0xff] %v2187
        %2338 = vst [vmem:[%s238 + $0x3b8] sm:$0xff] %v2189
        %2339 = vst [vmem:[%s238 + $0x3c0] sm:$0xff] %v1549
        %2340 = vst [vmem:[%s238 + $0x3c8] sm:$0xff] %v1551
        %2341 = vst [vmem:[%s238 + $0x3d0] sm:$0xff] %v1871
        %2342 = vst [vmem:[%s238 + $0x3d8] sm:$0xff] %v1873
        %2343 = vst [vmem:[%s238 + $0x3e0] sm:$0xff] %v2193
        %2344 = vst [vmem:[%s238 + $0x3e8] sm:$0xff] %v2195
        %2345 = vst [vmem:[%s238 + $0x3f0] sm:$0xff] %v1553
        %2346 = vst [vmem:[%s238 + $0x3f8] sm:$0xff] %v1555
        %2347 = vst [vmem:[%s238 + $0x400] sm:$0xff] %v1875
        %2348 = vst [vmem:[%s238 + $0x408] sm:$0xff] %v1877
        %2349 = vst [vmem:[%s238 + $0x410] sm:$0xff] %v2197
        %2350 = vst [vmem:[%s238 + $0x418] sm:$0xff] %v2199
        %2351 = vst [vmem:[%s238 + $0x420] sm:$0xff] %v1559
        %2352 = vst [vmem:[%s238 + $0x428] sm:$0xff] %v1561
        %2353 = vst [vmem:[%s238 + $0x430] sm:$0xff] %v1881
        %2354 = vst [vmem:[%s238 + $0x438] sm:$0xff] %v1883
        %2355 = vst [vmem:[%s238 + $0x440] sm:$0xff] %v2203
        %2356 = vst [vmem:[%s238 + $0x448] sm:$0xff] %v2205
        %2357 = vst [vmem:[%s238 + $0x450] sm:$0xff] %v1563
        %2358 = vst [vmem:[%s238 + $0x458] sm:$0xff] %v1565
        %2359 = vst [vmem:[%s238 + $0x460] sm:$0xff] %v1885
        %2360 = vst [vmem:[%s238 + $0x468] sm:$0xff] %v1887
        %2361 = vst [vmem:[%s238 + $0x470] sm:$0xff] %v2207
        %2362 = vst [vmem:[%s238 + $0x478] sm:$0xff] %v2209
        %2363 = vst [vmem:[%s238 + $0x480] sm:$0xf] %v1569
        %2364 = vst [vmem:[%s238 + $0x488] sm:$0xf] %v1571
        %2365 = vst [vmem:[%s238 + $0x490] sm:$0xf] %v1891
        %2366 = vst [vmem:[%s238 + $0x498] sm:$0xf] %v1893
        %2367 = vst [vmem:[%s238 + $0x4a0] sm:$0xf] %v2213
        %2368 = vst [vmem:[%s238 + $0x4a8] sm:$0xf] %v2215
        %s2369 = sand.u32 %s102, 1
        %s2370 = scalar_lea.sflag [#allocation4], %s2369
        %s2371 = sand.u32 %s102, 1
        %s2372 = smul.addr %s2371, 1200
        %s2373 = scalar_lea.vmem [#allocation8], %s2372
        // Predicated region
        $region45: #{tpu_custom_call.1} parent=31 // pred_check
          %p2374 = pneg %p112
        $region46: #{tpu_custom_call.1} parent=31 // pred_check_branch
          %2376 = sbr.rel (%p2374) target = $region48
        $region47: #{tpu_custom_call.1} parent=31 // pred_region
          %s2377 = smul.u32 6, %s21
          %s2379 = ssub.s32 19200, 19200
          %2380 = vsyncadd %s2370, %s2379
          %s2381 = smul.addr %s2377, 128
          %s2382 = scalar_lea.hbm %s3, %s2381
          %s2383 = sshll.u32 %s2373, 4
          %s2384 = int_to_ptr.vmem [resolvable:$true] %s2383
          %2389 = dma.vmem_to_hbm [thread:$0]  %s2384, 19200, %s2382, %s2370, 768, 1536, 48
        $region48: #{tpu_custom_call.1} parent=31 // pred_fallthru
          _
      $region32: #{tpu_custom_call.1} parent=5 // pred_fallthru
        _
      %p2390 = scmp.le.s32.totalorder 2, %s16
      // Predicated region
      $region49: #{tpu_custom_call.1} parent=5 // pred_check
        %p2391 = pneg %p2390
      $region50: #{tpu_custom_call.1} parent=5 // pred_check_branch
        %2393 = sbr.rel (%p2391) target = $region52
      $region51: #{tpu_custom_call.1} parent=5 // pred_region
        %s2394 = ssub.s32 %s16, 2
        // Predicated region
        $region53: #{tpu_custom_call.1} parent=51 // pred_check
          %p2395 = pneg %p118
        $region54: #{tpu_custom_call.1} parent=51 // pred_check_branch
          %2397 = sbr.rel (%p2395) target = $region56
        $region55: #{tpu_custom_call.1} parent=51 // pred_region
          %s2398 = sand.u32 %s103, 1
          %s2399 = scalar_lea.sflag [#allocation4], %s2398
          %s2400 = sand.u32 %s103, 1
          %s2401 = smul.addr %s2400, 1200
          %s2402 = scalar_lea.vmem [#allocation8], %s2401
          %2403 = dma.done %s2399, 19200
        $region56: #{tpu_custom_call.1} parent=51 // pred_fallthru
          _
      $region52: #{tpu_custom_call.1} parent=5 // pred_fallthru
        _
    $region6: #{tpu_custom_call.1} parent=1 // loop_footer
      %s20 = sadd.s32 1, %s16
    $region7: #{tpu_custom_call.1} parent=1 // loop_footer_branch
      %15 = sbr.rel target = $region3
    $region8: #{tpu_custom_call.1} parent=1 // loop_exit
      _
    %2404 = vsyncpa [#allocation3], 1
    %s2405 = scalar_lea.sflag [#allocation3], 1
    %2406 = vsyncpa %s2405, 1
    %2407 = vsyncpa [#allocation6], 1
    %s2408 = scalar_lea.sflag [#allocation6], 1
    %2409 = vsyncpa %s2408, 1
    %2410 = vsyncpa [#allocation4], 1
    %s2411 = scalar_lea.sflag [#allocation4], 1
    %2412 = vsyncpa %s2411, 1

</llo_original>
